<compile_context>
chip_gen: v6e
topology: v6e:2x2x1
jax: 0.10.0
libtpu: 0.0.40
codegen_flags: <defaults>
</compile_context>

<pallas_src>
import functools

import jax
import jax.numpy as jnp
from jax.experimental import pallas as pl
from jax.experimental.pallas import tpu as pltpu

# ----------------------------------------------------------------------------
# Small-shape configuration (scaled-down but structurally faithful):
#   out_channels C (orig 1024) -> 128
#   N            (orig 256)    -> 128
#   num_classes                -> 8
# ----------------------------------------------------------------------------
C_OUT = 128          # self.out_channels
N_CODE = 128         # self.N
NUM_CLASSES = 8


# ----------------------------------------------------------------------------
# Pallas kernel: MSFF projections + everything after, for one batch element.
# ----------------------------------------------------------------------------
def _decoder_kernel(xc_ref, whl_ref, w1_ref, b1_ref, w2_ref, b2_ref,
                    wf_lo_ref, wf_hi_ref, bf_ref, out_ref):
    C = w1_ref.shape[1]

    xc = xc_ref[0]                                   # (Cin_total, L) bf16

    # Fused MSFF_1 / MSFF_2 heads: one stacked 1x1 conv (+ identity BN) + ReLU.
    hx = jnp.dot(whl_ref[...], xc, preferred_element_type=jnp.float32)   # (2C, L)
    hx = jnp.maximum(hx, 0.0)
    xh_f32 = hx[:C]                                  # x_high (C, L) f32
    xl_f32 = hx[C:]                                  # x_low  (C, L) f32
    xh = xh_f32.astype(jnp.bfloat16)
    xl = xl_f32.astype(jnp.bfloat16)

    # convblock_1: 1x1 conv (+identity BN) + ReLU  -> (N, L)
    a1 = jnp.dot(w1_ref[...], xh, preferred_element_type=jnp.float32) + b1_ref[...]
    a1 = jnp.maximum(a1, 0.0)

    # Spatial softmax (dim=2 of (b, N, L)).  Normalization deferred to an EUP
    # reciprocal instead of a full (N, L) divide.
    m = jnp.max(a1, axis=1, keepdims=True)           # (N, 1)
    e = jnp.exp(a1 - m)                              # (N, L) f32
    inv_den = pl.reciprocal(jnp.sum(e, axis=1, keepdims=True), approx=True)
    p = (e * inv_den).astype(jnp.bfloat16)           # (N, L) softmax probs

    # adaptive avg-pool (1,1) over space, broadcast-add with x_low, convblock_2
    avg = jnp.mean(xh_f32, axis=1, keepdims=True)    # (C, 1) f32
    s = (avg + xl_f32).astype(jnp.bfloat16)          # (C, L)
    a2 = jnp.dot(w2_ref[...], s, preferred_element_type=jnp.float32) + b2_ref[...]
    a2 = jnp.maximum(a2, 0.0).astype(jnp.bfloat16)   # (N, L)

    # Reassociated codebook read-out:
    #   wf_hi @ (x_high @ p^T) @ a2  ==  ((wf_hi @ x_high) @ p^T) @ a2
    # Neither the (C, N) codebook nor the (C, L) out2 is materialized; the
    # x_high/p contraction is over L on both operands (no transpose).
    t = jnp.dot(wf_hi_ref[...], xh, preferred_element_type=jnp.float32)  # (nc, L)
    u = jax.lax.dot_general(
        t.astype(jnp.bfloat16), p,
        dimension_numbers=(((1,), (1,)), ((), ())),
        preferred_element_type=jnp.float32)           # (nc, N)

    # final_conv on concat([x_low, out2], dim=1): x_low half + codebook half.
    y = (jnp.dot(wf_lo_ref[...], xl, preferred_element_type=jnp.float32)
         + jnp.dot(u.astype(jnp.bfloat16), a2, preferred_element_type=jnp.float32)
         + bf_ref[...])
    out_ref[0] = y.astype(out_ref.dtype)


def decoder_core_pallas(xc, whl, w1, b1, w2, b2, wf, bf, h, w):
    """xc: (b, Cin_total, L) bf16 resized+concatenated backbone features.
    whl: (2C, Cin_total) stacked MSFF_1 / MSFF_2 1x1-projection weights.
    Returns (b, num_classes, h, w) float32."""
    b, c_tot, L = xc.shape
    N, C = w1.shape
    nc = wf.shape[0]

    b1r = b1.reshape(N, 1).astype(jnp.float32)
    b2r = b2.reshape(N, 1).astype(jnp.float32)
    bfr = bf.reshape(nc, 1).astype(jnp.float32)

    wf_bf = wf.astype(jnp.bfloat16)
    wf_lo = wf_bf[:, :C]
    wf_hi = wf_bf[:, C:]

    out = pl.pallas_call(
        _decoder_kernel,
        out_shape=jax.ShapeDtypeStruct((b, nc, L), jnp.float32),
        grid_spec=pltpu.PrefetchScalarGridSpec(
            num_scalar_prefetch=0,
            grid=(b,),
            in_specs=[
                pl.BlockSpec((1, c_tot, L), lambda i: (i, 0, 0)),   # xc (bf16)
                pl.BlockSpec((2 * C, c_tot), lambda i: (0, 0)),     # stacked MSFF w
                pl.BlockSpec((N, C), lambda i: (0, 0)),             # w1
                pl.BlockSpec((N, 1), lambda i: (0, 0)),             # b1
                pl.BlockSpec((N, C), lambda i: (0, 0)),             # w2
                pl.BlockSpec((N, 1), lambda i: (0, 0)),             # b2
                pl.BlockSpec((nc, C), lambda i: (0, 0)),            # wf[:, :C]
                pl.BlockSpec((nc, C), lambda i: (0, 0)),            # wf[:, C:]
                pl.BlockSpec((nc, 1), lambda i: (0, 0)),            # bf
            ],
            out_specs=pl.BlockSpec((1, nc, L), lambda i: (i, 0, 0)),
        ),
        compiler_params=pltpu.CompilerParams(
            dimension_semantics=("parallel",)),
    )(xc, whl.astype(jnp.bfloat16),
      w1.astype(jnp.bfloat16), b1r,
      w2.astype(jnp.bfloat16), b2r,
      wf_lo, wf_hi, bfr)
    return out.reshape(b, nc, h, w)


# ----------------------------------------------------------------------------
# Deterministic parameter initialization (kaiming-normal style, like
# _init_weight; BN folded to identity: weight=1, bias=0, running stats 0/1).
# ----------------------------------------------------------------------------
def _kaiming(key, shape, fan_in):
    return jax.random.normal(key, shape, jnp.float32) * jnp.sqrt(2.0 / fan_in)


def init_params(key, c_in, c_l1, c_l2):
    ks = jax.random.split(key, 10)
    msff1 = {
        'w_in': _kaiming(ks[0], (C_OUT, c_in), c_in),
        'w_l1': _kaiming(ks[1], (C_OUT, c_l1), c_l1),
        'w_l2': _kaiming(ks[2], (C_OUT, c_l2), c_l2),
    }
    msff2 = {
        'w_in': _kaiming(ks[3], (C_OUT, c_in), c_in),
        'w_l1': _kaiming(ks[4], (C_OUT, c_l1), c_l1),
        'w_l2': _kaiming(ks[5], (C_OUT, c_l2), c_l2),
    }
    params = {
        'msff1': msff1,
        'msff2': msff2,
        'w1': _kaiming(ks[6], (N_CODE, C_OUT), C_OUT),
        'b1': jnp.zeros((N_CODE,), jnp.float32),            # BN bias (zeroed)
        'w2': _kaiming(ks[7], (N_CODE, C_OUT), C_OUT),
        'b2': jnp.zeros((N_CODE,), jnp.float32),             # BN bias (zeroed)
        'wf': _kaiming(ks[8], (NUM_CLASSES, 2 * C_OUT), 2 * C_OUT),
        'bf': (jax.random.uniform(ks[9], (NUM_CLASSES,), jnp.float32) - 0.5)
              * (1.0 / jnp.sqrt(2.0 * C_OUT)),
    }
    return params


@jax.jit
def decoder_forward(inp, llf1, llf2, params):
    # b, _, w, h = low_level_feat_2.size()  -> output spatial extent
    h, w = llf2.shape[2], llf2.shape[3]
    b = inp.shape[0]

    def nearest(x):
        return jax.image.resize(
            x, (x.shape[0], x.shape[1], h, w), method='nearest')

    # Nearest resize commutes with the 1x1 MSFF projections, so only the raw
    # (cheap, narrow-channel) features cross the kernel boundary.
    xc = jnp.concatenate([nearest(inp), nearest(llf1), nearest(llf2)], axis=1)
    xc = xc.reshape(b, xc.shape[1], h * w).astype(jnp.bfloat16)

    # Stack the MSFF_1 (x_high) and MSFF_2 (x_low) projection weights so both
    # heads come out of a single (2C, Cin_total) matmul inside the kernel.
    wh = jnp.concatenate([params['msff1']['w_in'],
                          params['msff1']['w_l1'],
                          params['msff1']['w_l2']], axis=1)
    wl = jnp.concatenate([params['msff2']['w_in'],
                          params['msff2']['w_l1'],
                          params['msff2']['w_l2']], axis=1)
    whl = jnp.concatenate([wh, wl], axis=0)

    return decoder_core_pallas(
        xc, whl,
        params['w1'], params['b1'],
        params['w2'], params['b2'],
        params['wf'], params['bf'],
        h, w)


if __name__ == "__main__":
    key = jax.random.PRNGKey(0)
    k_in, k_l1, k_l2, k_par = jax.random.split(key, 4)

    b = 2
    c_in, c_l1, c_l2 = 64, 16, 32            # scaled-down backbone channels
    inp = jax.random.normal(k_in, (b, c_in, 8, 8), jnp.float32)     # deepest feat
    llf1 = jax.random.normal(k_l1, (b, c_l1, 32, 32), jnp.float32)  # low-level 1
    llf2 = jax.random.normal(k_l2, (b, c_l2, 16, 16), jnp.float32)  # low-level 2

    params = init_params(k_par, c_in, c_l1, c_l2)

    out = decoder_forward(inp, llf1, llf2, params)
    jax.block_until_ready(out)
    assert out.shape == (b, NUM_CLASSES, 16, 16), out.shape
    assert bool(jnp.isfinite(out).all()), "non-finite output"
    print("KERNEL_OK")
</pallas_src>

<mosaic_0001>
module attributes {stable_mosaic.version = 11 : i64} {
  func.func @_decoder_kernel(%arg0: i32, %arg1: memref<1x112x256xbf16, #tpu.memory_space<vmem>>, %arg2: memref<256x112xbf16, #tpu.memory_space<vmem>>, %arg3: memref<128x128xbf16, #tpu.memory_space<vmem>>, %arg4: memref<128x1xf32, #tpu.memory_space<vmem>>, %arg5: memref<128x128xbf16, #tpu.memory_space<vmem>>, %arg6: memref<128x1xf32, #tpu.memory_space<vmem>>, %arg7: memref<8x128xbf16, #tpu.memory_space<vmem>>, %arg8: memref<8x128xbf16, #tpu.memory_space<vmem>>, %arg9: memref<8x1xf32, #tpu.memory_space<vmem>>, %arg10: memref<1x8x256xf32, #tpu.memory_space<vmem>>) attributes {dimension_semantics = [#tpu.dimension_semantics<parallel>], iteration_bounds = array<i64: 2>, scalar_prefetch = 0 : i64, scratch_operands = 0 : i64, tpu.core_type = #tpu.core_type<tc>, window_params = [{transform_indices = @transform_0, window_bounds = array<i64: 1, 112, 256>}, {pipeline_mode = #tpu.pipeline_mode<synchronous>, transform_indices = @transform_1, window_bounds = array<i64: 256, 112>}, {pipeline_mode = #tpu.pipeline_mode<synchronous>, transform_indices = @transform_2, window_bounds = array<i64: 128, 128>}, {pipeline_mode = #tpu.pipeline_mode<synchronous>, transform_indices = @transform_3, window_bounds = array<i64: 128, 1>}, {pipeline_mode = #tpu.pipeline_mode<synchronous>, transform_indices = @transform_4, window_bounds = array<i64: 128, 128>}, {pipeline_mode = #tpu.pipeline_mode<synchronous>, transform_indices = @transform_5, window_bounds = array<i64: 128, 1>}, {pipeline_mode = #tpu.pipeline_mode<synchronous>, transform_indices = @transform_6, window_bounds = array<i64: 8, 128>}, {pipeline_mode = #tpu.pipeline_mode<synchronous>, transform_indices = @transform_7, window_bounds = array<i64: 8, 128>}, {pipeline_mode = #tpu.pipeline_mode<synchronous>, transform_indices = @transform_8, window_bounds = array<i64: 8, 1>}, {transform_indices = @transform_9, window_bounds = array<i64: 1, 8, 256>}]} {
    %c0 = arith.constant 0 : index
    %c0_0 = arith.constant 0 : index
    %c0_1 = arith.constant 0 : index
    %0 = vector.load %arg1[%c0, %c0_0, %c0_1] : memref<1x112x256xbf16, #tpu.memory_space<vmem>>, vector<1x112x256xbf16>
    %1 = vector.shape_cast %0 : vector<1x112x256xbf16> to vector<112x256xbf16>
    %c0_2 = arith.constant 0 : index
    %c0_3 = arith.constant 0 : index
    %2 = vector.load %arg2[%c0_2, %c0_3] : memref<256x112xbf16, #tpu.memory_space<vmem>>, vector<256x112xbf16>
    %cst = arith.constant dense<0.000000e+00> : vector<256x256xf32>
    %3 = tpu.matmul %2, %1, %cst {dimension_numbers = #tpu.dot_dimension_numbers<[1], [0], [0], [1], [0, 0, 1, 1], [], []>} : vector<256x112xbf16>, vector<112x256xbf16>, vector<256x256xf32> -> vector<256x256xf32>
    %cst_4 = arith.constant 0.000000e+00 : f32
    %4 = vector.broadcast %cst_4 : f32 to vector<256x256xf32>
    %5 = arith.maximumf %3, %4 : vector<256x256xf32>
    %6 = vector.extract_strided_slice %5 {offsets = [0, 0], sizes = [128, 256], strides = [1, 1]} : vector<256x256xf32> to vector<128x256xf32>
    %7 = vector.extract_strided_slice %5 {offsets = [128, 0], sizes = [128, 256], strides = [1, 1]} : vector<256x256xf32> to vector<128x256xf32>
    %8 = arith.truncf %6 : vector<128x256xf32> to vector<128x256xbf16>
    %9 = arith.truncf %7 : vector<128x256xf32> to vector<128x256xbf16>
    %c0_5 = arith.constant 0 : index
    %c0_6 = arith.constant 0 : index
    %10 = vector.load %arg3[%c0_5, %c0_6] : memref<128x128xbf16, #tpu.memory_space<vmem>>, vector<128x128xbf16>
    %cst_7 = arith.constant dense<0.000000e+00> : vector<128x256xf32>
    %11 = tpu.matmul %10, %8, %cst_7 {dimension_numbers = #tpu.dot_dimension_numbers<[1], [0], [0], [1], [0, 0, 1, 1], [], []>} : vector<128x128xbf16>, vector<128x256xbf16>, vector<128x256xf32> -> vector<128x256xf32>
    %c0_8 = arith.constant 0 : index
    %c0_9 = arith.constant 0 : index
    %12 = vector.load %arg4[%c0_8, %c0_9] : memref<128x1xf32, #tpu.memory_space<vmem>>, vector<128x1xf32>
    %13 = vector.broadcast %12 : vector<128x1xf32> to vector<128x256xf32>
    %14 = arith.addf %11, %13 : vector<128x256xf32>
    %cst_10 = arith.constant 0.000000e+00 : f32
    %15 = vector.broadcast %cst_10 : f32 to vector<128x256xf32>
    %16 = arith.maximumf %14, %15 : vector<128x256xf32>
    %cst_11 = arith.constant dense<0xFF800000> : vector<128xf32>
    %17 = vector.multi_reduction <maximumf>, %16, %cst_11 [1] : vector<128x256xf32> to vector<128xf32>
    %18 = vector.shape_cast %17 : vector<128xf32> to vector<128x1xf32>
    %19 = vector.broadcast %18 : vector<128x1xf32> to vector<128x256xf32>
    %20 = arith.subf %16, %19 : vector<128x256xf32>
    %21 = math.exp %20 : vector<128x256xf32>
    %cst_12 = arith.constant dense<0.000000e+00> : vector<128xf32>
    %22 = vector.multi_reduction <add>, %21, %cst_12 [1] : vector<128x256xf32> to vector<128xf32>
    %23 = vector.shape_cast %22 : vector<128xf32> to vector<128x1xf32>
    %24 = tpu.reciprocal %23 {approx = true} : vector<128x1xf32> -> vector<128x1xf32>
    %25 = vector.broadcast %24 : vector<128x1xf32> to vector<128x256xf32>
    %26 = arith.mulf %21, %25 : vector<128x256xf32>
    %27 = arith.truncf %26 : vector<128x256xf32> to vector<128x256xbf16>
    %cst_13 = arith.constant dense<0.000000e+00> : vector<128xf32>
    %28 = vector.multi_reduction <add>, %6, %cst_13 [1] : vector<128x256xf32> to vector<128xf32>
    %29 = vector.shape_cast %28 : vector<128xf32> to vector<128x1xf32>
    %cst_14 = arith.constant 2.560000e+02 : f32
    %30 = vector.broadcast %cst_14 : f32 to vector<128x1xf32>
    %31 = arith.divf %29, %30 : vector<128x1xf32>
    %32 = vector.broadcast %31 : vector<128x1xf32> to vector<128x256xf32>
    %33 = arith.addf %32, %7 : vector<128x256xf32>
    %34 = arith.truncf %33 : vector<128x256xf32> to vector<128x256xbf16>
    %c0_15 = arith.constant 0 : index
    %c0_16 = arith.constant 0 : index
    %35 = vector.load %arg5[%c0_15, %c0_16] : memref<128x128xbf16, #tpu.memory_space<vmem>>, vector<128x128xbf16>
    %cst_17 = arith.constant dense<0.000000e+00> : vector<128x256xf32>
    %36 = tpu.matmul %35, %34, %cst_17 {dimension_numbers = #tpu.dot_dimension_numbers<[1], [0], [0], [1], [0, 0, 1, 1], [], []>} : vector<128x128xbf16>, vector<128x256xbf16>, vector<128x256xf32> -> vector<128x256xf32>
    %c0_18 = arith.constant 0 : index
    %c0_19 = arith.constant 0 : index
    %37 = vector.load %arg6[%c0_18, %c0_19] : memref<128x1xf32, #tpu.memory_space<vmem>>, vector<128x1xf32>
    %38 = vector.broadcast %37 : vector<128x1xf32> to vector<128x256xf32>
    %39 = arith.addf %36, %38 : vector<128x256xf32>
    %cst_20 = arith.constant 0.000000e+00 : f32
    %40 = vector.broadcast %cst_20 : f32 to vector<128x256xf32>
    %41 = arith.maximumf %39, %40 : vector<128x256xf32>
    %42 = arith.truncf %41 : vector<128x256xf32> to vector<128x256xbf16>
    %c0_21 = arith.constant 0 : index
    %c0_22 = arith.constant 0 : index
    %43 = vector.load %arg8[%c0_21, %c0_22] : memref<8x128xbf16, #tpu.memory_space<vmem>>, vector<8x128xbf16>
    %cst_23 = arith.constant dense<0.000000e+00> : vector<8x256xf32>
    %44 = tpu.matmul %43, %8, %cst_23 {dimension_numbers = #tpu.dot_dimension_numbers<[1], [0], [0], [1], [0, 0, 1, 1], [], []>} : vector<8x128xbf16>, vector<128x256xbf16>, vector<8x256xf32> -> vector<8x256xf32>
    %45 = arith.truncf %44 : vector<8x256xf32> to vector<8x256xbf16>
    %cst_24 = arith.constant dense<0.000000e+00> : vector<8x128xf32>
    %46 = tpu.matmul %45, %27, %cst_24 {dimension_numbers = #tpu.dot_dimension_numbers<[1], [1], [0], [0], [0, 0, 1, 0], [], []>} : vector<8x256xbf16>, vector<128x256xbf16>, vector<8x128xf32> -> vector<8x128xf32>
    %c0_25 = arith.constant 0 : index
    %c0_26 = arith.constant 0 : index
    %47 = vector.load %arg7[%c0_25, %c0_26] : memref<8x128xbf16, #tpu.memory_space<vmem>>, vector<8x128xbf16>
    %cst_27 = arith.constant dense<0.000000e+00> : vector<8x256xf32>
    %48 = tpu.matmul %47, %9, %cst_27 {dimension_numbers = #tpu.dot_dimension_numbers<[1], [0], [0], [1], [0, 0, 1, 1], [], []>} : vector<8x128xbf16>, vector<128x256xbf16>, vector<8x256xf32> -> vector<8x256xf32>
    %49 = arith.truncf %46 : vector<8x128xf32> to vector<8x128xbf16>
    %cst_28 = arith.constant dense<0.000000e+00> : vector<8x256xf32>
    %50 = tpu.matmul %49, %42, %cst_28 {dimension_numbers = #tpu.dot_dimension_numbers<[1], [0], [0], [1], [0, 0, 1, 1], [], []>} : vector<8x128xbf16>, vector<128x256xbf16>, vector<8x256xf32> -> vector<8x256xf32>
    %51 = arith.addf %48, %50 : vector<8x256xf32>
    %c0_29 = arith.constant 0 : index
    %c0_30 = arith.constant 0 : index
    %52 = vector.load %arg9[%c0_29, %c0_30] : memref<8x1xf32, #tpu.memory_space<vmem>>, vector<8x1xf32>
    %53 = vector.broadcast %52 : vector<8x1xf32> to vector<8x256xf32>
    %54 = arith.addf %51, %53 : vector<8x256xf32>
    %c0_31 = arith.constant 0 : index
    %c0_32 = arith.constant 0 : index
    %c0_33 = arith.constant 0 : index
    %55 = vector.load %arg10[%c0_31, %c0_32, %c0_33] : memref<1x8x256xf32, #tpu.memory_space<vmem>>, vector<1x8x256xf32>
    %56 = vector.shape_cast %55 : vector<1x8x256xf32> to vector<8x256xf32>
    %57 = vector.shape_cast %54 : vector<8x256xf32> to vector<1x8x256xf32>
    tpu.vector_store %arg10[%c0_31, %c0_32, %c0_33], %57 {strides = array<i32>} : memref<1x8x256xf32, #tpu.memory_space<vmem>>, vector<1x8x256xf32>,
    return
  }
  func.func @transform_0(%arg0: i32) -> (i32, i32, i32) {
    %c0_i32 = arith.constant 0 : i32
    %c0_i32_0 = arith.constant 0 : i32
    %c0_i32_1 = arith.constant 0 : i32
    return %arg0, %c0_i32, %c0_i32_0 : i32, i32, i32
  }
  func.func @transform_1(%arg0: i32) -> (i32, i32) {
    %c0_i32 = arith.constant 0 : i32
    %c0_i32_0 = arith.constant 0 : i32
    %c0_i32_1 = arith.constant 0 : i32
    return %c0_i32, %c0_i32_0 : i32, i32
  }
  func.func @transform_2(%arg0: i32) -> (i32, i32) {
    %c0_i32 = arith.constant 0 : i32
    %c0_i32_0 = arith.constant 0 : i32
    %c0_i32_1 = arith.constant 0 : i32
    return %c0_i32, %c0_i32_0 : i32, i32
  }
  func.func @transform_3(%arg0: i32) -> (i32, i32) {
    %c0_i32 = arith.constant 0 : i32
    %c0_i32_0 = arith.constant 0 : i32
    %c0_i32_1 = arith.constant 0 : i32
    return %c0_i32, %c0_i32_0 : i32, i32
  }
  func.func @transform_4(%arg0: i32) -> (i32, i32) {
    %c0_i32 = arith.constant 0 : i32
    %c0_i32_0 = arith.constant 0 : i32
    %c0_i32_1 = arith.constant 0 : i32
    return %c0_i32, %c0_i32_0 : i32, i32
  }
  func.func @transform_5(%arg0: i32) -> (i32, i32) {
    %c0_i32 = arith.constant 0 : i32
    %c0_i32_0 = arith.constant 0 : i32
    %c0_i32_1 = arith.constant 0 : i32
    return %c0_i32, %c0_i32_0 : i32, i32
  }
  func.func @transform_6(%arg0: i32) -> (i32, i32) {
    %c0_i32 = arith.constant 0 : i32
    %c0_i32_0 = arith.constant 0 : i32
    %c0_i32_1 = arith.constant 0 : i32
    return %c0_i32, %c0_i32_0 : i32, i32
  }
  func.func @transform_7(%arg0: i32) -> (i32, i32) {
    %c0_i32 = arith.constant 0 : i32
    %c0_i32_0 = arith.constant 0 : i32
    %c0_i32_1 = arith.constant 0 : i32
    return %c0_i32, %c0_i32_0 : i32, i32
  }
  func.func @transform_8(%arg0: i32) -> (i32, i32) {
    %c0_i32 = arith.constant 0 : i32
    %c0_i32_0 = arith.constant 0 : i32
    %c0_i32_1 = arith.constant 0 : i32
    return %c0_i32, %c0_i32_0 : i32, i32
  }
  func.func @transform_9(%arg0: i32) -> (i32, i32, i32) {
    %c0_i32 = arith.constant 0 : i32
    %c0_i32_0 = arith.constant 0 : i32
    %c0_i32_1 = arith.constant 0 : i32
    return %arg0, %c0_i32, %c0_i32_0 : i32, i32, i32
  }
}

</mosaic_0001>

<llo_original>
// kernel: decoder_forward.1
$region0: #{decoder_forward.1}
  #allocation0 [shape = 'u32[]', space=smem, size = 0x4, offset = 0x4, fixed_abs, tag = 'smem constant byte address 0x4 - core index']
  #allocation1 [shape = 'u32[144,128]{1,0:T(1,128)}', space=vmem, size = 0x12000, scoped, tag = 'internal scratch']
  %s0 = inlined_call_operand.vmem [shape: bf16[2,112,256], index: 0, kind: input, shape index: {}]
  %s1 = inlined_call_operand.vmem [shape: bf16[256,112], index: 1, kind: input, shape index: {}]
  %s2 = inlined_call_operand.vmem [shape: bf16[128,128], index: 2, kind: input, shape index: {}]
  %s3 = inlined_call_operand.vmem [shape: f32[128,1], index: 3, kind: input, shape index: {}]
  %s4 = inlined_call_operand.vmem [shape: bf16[128,128], index: 4, kind: input, shape index: {}]
  %s5 = inlined_call_operand.vmem [shape: f32[128,1], index: 5, kind: input, shape index: {}]
  %s6 = inlined_call_operand.vmem [shape: bf16[8,128], index: 6, kind: input, shape index: {}]
  %s7 = inlined_call_operand.vmem [shape: bf16[8,128], index: 7, kind: input, shape index: {}]
  %s8 = inlined_call_operand.vmem [shape: f32[8,1], index: 8, kind: input, shape index: {}]
  %s9 = inlined_call_operand.vmem [shape: f32[2,8,256], index: 9, kind: output, shape index: {}]
  %s10 = sld [smem:[#allocation0]]
  $region69: #{decoder_forward.1} parent=0
    _
  %s12 = ssub.s32 1, %s10
  %s13 = scalar_select 0, %s12, %s10
  loop: start=0, step=1, limit=4
  $region2: #{decoder_forward.1} parent=0 // loop_pre_header
    _
  $region3: #{decoder_forward.1} parent=0 // loop_header
    %s15 = sphi 0, %s19
    %p16 = scmp.ge.s32.totalorder %s15, 4
    %s25 = sphi 0, %s27
    %s28 = sphi 0, %s25
    %s29 = sphi 0, %s28
    %s45 = sphi 0, %s29
    %s49 = sphi 0, %s49
    %s51 = sphi 0, %s49
    %s52 = sphi 0, %s51
    %s66 = sphi 0, %s52
    %s70 = sphi 0, %s70
    %s72 = sphi 0, %s70
    %s73 = sphi 0, %s72
    %s87 = sphi 0, %s73
    %s91 = sphi 0, %s91
    %s93 = sphi 0, %s91
    %s94 = sphi 0, %s93
    %s108 = sphi 0, %s94
    %s112 = sphi 0, %s112
    %s114 = sphi 0, %s112
    %s115 = sphi 0, %s114
    %s129 = sphi 0, %s115
    %s133 = sphi 0, %s133
    %s135 = sphi 0, %s133
    %s136 = sphi 0, %s135
    %s150 = sphi 0, %s136
    %s154 = sphi 0, %s154
    %s156 = sphi 0, %s154
    %s157 = sphi 0, %s156
    %s171 = sphi 0, %s157
    %s175 = sphi 0, %s175
    %s177 = sphi 0, %s175
    %s178 = sphi 0, %s177
    %s192 = sphi 0, %s178
    %s196 = sphi 0, %s196
    %s198 = sphi 0, %s196
    %s199 = sphi 0, %s198
    %s213 = sphi 0, %s199
    %s219 = sphi 0, %s221
    %s222 = sphi 0, %s219
    %s223 = sphi 0, %s222
    %s239 = sphi 0, %s223
  $region4: #{decoder_forward.1} parent=0 // loop_header_branch
    %18 = sbr.rel (%p16) target = $region8
  $region5: #{decoder_forward.1} parent=0 // loop_body
    %s20 = ssub.s32 %s15, 1
    %s21 = ssub.s32 %s15, 2
    %s22 = sadd.s32 %s15, 1
    %s23 = ssub.s32 %s15, %s22
    %p24 = scmp.eq.s32.totalorder %s23, 0
    %s26 = sadd.s32 %s25, 1
    %s27 = scalar_select %p24, %s25, %s26
    %p30 = pneg %p24
    %p31 = scmp.eq.s32.totalorder %s15, 1
    %p32 = por %p30, %p31
    %p33 = scmp.ne.s32.totalorder %s25, %s28
    %p34 = scmp.eq.s32.totalorder %s15, 0
    %p35 = por %p33, %p34
    %p36 = scmp.ne.s32.totalorder %s25, %s28
    %p37 = scmp.eq.s32.totalorder %s20, 1
    %p38 = por %p36, %p37
    %p39 = scmp.ne.s32.totalorder %s28, %s29
    %p40 = scmp.eq.s32.totalorder %s20, 0
    %p41 = por %p39, %p40
    %p42 = scmp.ne.s32.totalorder %s28, %s29
    %p43 = scmp.eq.s32.totalorder %s21, 1
    %p44 = por %p42, %p43
    %p46 = scmp.ne.s32.totalorder %s29, %s45
    %p47 = scmp.eq.s32.totalorder %s21, 0
    %p48 = por %p46, %p47
    %s50 = sadd.s32 %s49, 1
    %p53 = scmp.eq.s32.totalorder %s15, 1
    %p54 = scmp.ne.s32.totalorder %s49, %s51
    %p55 = scmp.eq.s32.totalorder %s15, 0
    %p56 = por %p54, %p55
    %p57 = scmp.ne.s32.totalorder %s49, %s51
    %p58 = scmp.eq.s32.totalorder %s20, 1
    %p59 = por %p57, %p58
    %p60 = scmp.ne.s32.totalorder %s51, %s52
    %p61 = scmp.eq.s32.totalorder %s20, 0
    %p62 = por %p60, %p61
    %p63 = scmp.ne.s32.totalorder %s51, %s52
    %p64 = scmp.eq.s32.totalorder %s21, 1
    %p65 = por %p63, %p64
    %p67 = scmp.ne.s32.totalorder %s52, %s66
    %p68 = scmp.eq.s32.totalorder %s21, 0
    %p69 = por %p67, %p68
    %s71 = sadd.s32 %s70, 1
    %p74 = scmp.eq.s32.totalorder %s15, 1
    %p75 = scmp.ne.s32.totalorder %s70, %s72
    %p76 = scmp.eq.s32.totalorder %s15, 0
    %p77 = por %p75, %p76
    %p78 = scmp.ne.s32.totalorder %s70, %s72
    %p79 = scmp.eq.s32.totalorder %s20, 1
    %p80 = por %p78, %p79
    %p81 = scmp.ne.s32.totalorder %s72, %s73
    %p82 = scmp.eq.s32.totalorder %s20, 0
    %p83 = por %p81, %p82
    %p84 = scmp.ne.s32.totalorder %s72, %s73
    %p85 = scmp.eq.s32.totalorder %s21, 1
    %p86 = por %p84, %p85
    %p88 = scmp.ne.s32.totalorder %s73, %s87
    %p89 = scmp.eq.s32.totalorder %s21, 0
    %p90 = por %p88, %p89
    %s92 = sadd.s32 %s91, 1
    %p95 = scmp.eq.s32.totalorder %s15, 1
    %p96 = scmp.ne.s32.totalorder %s91, %s93
    %p97 = scmp.eq.s32.totalorder %s15, 0
    %p98 = por %p96, %p97
    %p99 = scmp.ne.s32.totalorder %s91, %s93
    %p100 = scmp.eq.s32.totalorder %s20, 1
    %p101 = por %p99, %p100
    %p102 = scmp.ne.s32.totalorder %s93, %s94
    %p103 = scmp.eq.s32.totalorder %s20, 0
    %p104 = por %p102, %p103
    %p105 = scmp.ne.s32.totalorder %s93, %s94
    %p106 = scmp.eq.s32.totalorder %s21, 1
    %p107 = por %p105, %p106
    %p109 = scmp.ne.s32.totalorder %s94, %s108
    %p110 = scmp.eq.s32.totalorder %s21, 0
    %p111 = por %p109, %p110
    %s113 = sadd.s32 %s112, 1
    %p116 = scmp.eq.s32.totalorder %s15, 1
    %p117 = scmp.ne.s32.totalorder %s112, %s114
    %p118 = scmp.eq.s32.totalorder %s15, 0
    %p119 = por %p117, %p118
    %p120 = scmp.ne.s32.totalorder %s112, %s114
    %p121 = scmp.eq.s32.totalorder %s20, 1
    %p122 = por %p120, %p121
    %p123 = scmp.ne.s32.totalorder %s114, %s115
    %p124 = scmp.eq.s32.totalorder %s20, 0
    %p125 = por %p123, %p124
    %p126 = scmp.ne.s32.totalorder %s114, %s115
    %p127 = scmp.eq.s32.totalorder %s21, 1
    %p128 = por %p126, %p127
    %p130 = scmp.ne.s32.totalorder %s115, %s129
    %p131 = scmp.eq.s32.totalorder %s21, 0
    %p132 = por %p130, %p131
    %s134 = sadd.s32 %s133, 1
    %p137 = scmp.eq.s32.totalorder %s15, 1
    %p138 = scmp.ne.s32.totalorder %s133, %s135
    %p139 = scmp.eq.s32.totalorder %s15, 0
    %p140 = por %p138, %p139
    %p141 = scmp.ne.s32.totalorder %s133, %s135
    %p142 = scmp.eq.s32.totalorder %s20, 1
    %p143 = por %p141, %p142
    %p144 = scmp.ne.s32.totalorder %s135, %s136
    %p145 = scmp.eq.s32.totalorder %s20, 0
    %p146 = por %p144, %p145
    %p147 = scmp.ne.s32.totalorder %s135, %s136
    %p148 = scmp.eq.s32.totalorder %s21, 1
    %p149 = por %p147, %p148
    %p151 = scmp.ne.s32.totalorder %s136, %s150
    %p152 = scmp.eq.s32.totalorder %s21, 0
    %p153 = por %p151, %p152
    %s155 = sadd.s32 %s154, 1
    %p158 = scmp.eq.s32.totalorder %s15, 1
    %p159 = scmp.ne.s32.totalorder %s154, %s156
    %p160 = scmp.eq.s32.totalorder %s15, 0
    %p161 = por %p159, %p160
    %p162 = scmp.ne.s32.totalorder %s154, %s156
    %p163 = scmp.eq.s32.totalorder %s20, 1
    %p164 = por %p162, %p163
    %p165 = scmp.ne.s32.totalorder %s156, %s157
    %p166 = scmp.eq.s32.totalorder %s20, 0
    %p167 = por %p165, %p166
    %p168 = scmp.ne.s32.totalorder %s156, %s157
    %p169 = scmp.eq.s32.totalorder %s21, 1
    %p170 = por %p168, %p169
    %p172 = scmp.ne.s32.totalorder %s157, %s171
    %p173 = scmp.eq.s32.totalorder %s21, 0
    %p174 = por %p172, %p173
    %s176 = sadd.s32 %s175, 1
    %p179 = scmp.eq.s32.totalorder %s15, 1
    %p180 = scmp.ne.s32.totalorder %s175, %s177
    %p181 = scmp.eq.s32.totalorder %s15, 0
    %p182 = por %p180, %p181
    %p183 = scmp.ne.s32.totalorder %s175, %s177
    %p184 = scmp.eq.s32.totalorder %s20, 1
    %p185 = por %p183, %p184
    %p186 = scmp.ne.s32.totalorder %s177, %s178
    %p187 = scmp.eq.s32.totalorder %s20, 0
    %p188 = por %p186, %p187
    %p189 = scmp.ne.s32.totalorder %s177, %s178
    %p190 = scmp.eq.s32.totalorder %s21, 1
    %p191 = por %p189, %p190
    %p193 = scmp.ne.s32.totalorder %s178, %s192
    %p194 = scmp.eq.s32.totalorder %s21, 0
    %p195 = por %p193, %p194
    %s197 = sadd.s32 %s196, 1
    %p200 = scmp.eq.s32.totalorder %s15, 1
    %p201 = scmp.ne.s32.totalorder %s196, %s198
    %p202 = scmp.eq.s32.totalorder %s15, 0
    %p203 = por %p201, %p202
    %p204 = scmp.ne.s32.totalorder %s196, %s198
    %p205 = scmp.eq.s32.totalorder %s20, 1
    %p206 = por %p204, %p205
    %p207 = scmp.ne.s32.totalorder %s198, %s199
    %p208 = scmp.eq.s32.totalorder %s20, 0
    %p209 = por %p207, %p208
    %p210 = scmp.ne.s32.totalorder %s198, %s199
    %p211 = scmp.eq.s32.totalorder %s21, 1
    %p212 = por %p210, %p211
    %p214 = scmp.ne.s32.totalorder %s199, %s213
    %p215 = scmp.eq.s32.totalorder %s21, 0
    %p216 = por %p214, %p215
    %s217 = ssub.s32 %s15, %s22
    %p218 = scmp.eq.s32.totalorder %s217, 0
    %s220 = sadd.s32 %s219, 1
    %s221 = scalar_select %p218, %s219, %s220
    %p224 = pneg %p218
    %p225 = scmp.eq.s32.totalorder %s15, 1
    %p226 = por %p224, %p225
    %p227 = scmp.ne.s32.totalorder %s219, %s222
    %p228 = scmp.eq.s32.totalorder %s15, 0
    %p229 = por %p227, %p228
    %p230 = scmp.ne.s32.totalorder %s219, %s222
    %p231 = scmp.eq.s32.totalorder %s20, 1
    %p232 = por %p230, %p231
    %p233 = scmp.ne.s32.totalorder %s222, %s223
    %p234 = scmp.eq.s32.totalorder %s20, 0
    %p235 = por %p233, %p234
    %p236 = scmp.ne.s32.totalorder %s222, %s223
    %p237 = scmp.eq.s32.totalorder %s21, 1
    %p238 = por %p236, %p237
    %p240 = scmp.ne.s32.totalorder %s223, %s239
    %p241 = scmp.eq.s32.totalorder %s21, 0
    %p242 = por %p240, %p241
    %p243 = scmp.le.s32.totalorder 1, %s15
    %p244 = scmp.lt.s32.totalorder %s15, 3
    %p245 = pnand %p243, %p244
    %p246 = pneg %p245
    // Predicated region
    $region9: #{decoder_forward.1} parent=5 // pred_check
      _
    $region10: #{decoder_forward.1} parent=5 // pred_check_branch
      %248 = sbr.rel (%p245) target = $region12
    $region11: #{decoder_forward.1} parent=5 // pred_region
      %s249 = ssub.s32 %s15, 1
      // Predicated region
      $region13: #{decoder_forward.1} parent=11 // pred_check
        %p250 = pneg %p62
      $region14: #{decoder_forward.1} parent=11 // pred_check_branch
        %252 = sbr.rel (%p250) target = $region16
      $region15: #{decoder_forward.1} parent=11 // pred_region
        _
      $region16: #{decoder_forward.1} parent=11 // pred_fallthru
        _
      // Predicated region
      $region17: #{decoder_forward.1} parent=11 // pred_check
        %p253 = pneg %p83
      $region18: #{decoder_forward.1} parent=11 // pred_check_branch
        %255 = sbr.rel (%p253) target = $region20
      $region19: #{decoder_forward.1} parent=11 // pred_region
        _
      $region20: #{decoder_forward.1} parent=11 // pred_fallthru
        _
      // Predicated region
      $region21: #{decoder_forward.1} parent=11 // pred_check
        %p256 = pneg %p104
      $region22: #{decoder_forward.1} parent=11 // pred_check_branch
        %258 = sbr.rel (%p256) target = $region24
      $region23: #{decoder_forward.1} parent=11 // pred_region
        _
      $region24: #{decoder_forward.1} parent=11 // pred_fallthru
        _
      // Predicated region
      $region25: #{decoder_forward.1} parent=11 // pred_check
        %p259 = pneg %p125
      $region26: #{decoder_forward.1} parent=11 // pred_check_branch
        %261 = sbr.rel (%p259) target = $region28
      $region27: #{decoder_forward.1} parent=11 // pred_region
        _
      $region28: #{decoder_forward.1} parent=11 // pred_fallthru
        _
      // Predicated region
      $region29: #{decoder_forward.1} parent=11 // pred_check
        %p262 = pneg %p146
      $region30: #{decoder_forward.1} parent=11 // pred_check_branch
        %264 = sbr.rel (%p262) target = $region32
      $region31: #{decoder_forward.1} parent=11 // pred_region
        _
      $region32: #{decoder_forward.1} parent=11 // pred_fallthru
        _
      // Predicated region
      $region33: #{decoder_forward.1} parent=11 // pred_check
        %p265 = pneg %p167
      $region34: #{decoder_forward.1} parent=11 // pred_check_branch
        %267 = sbr.rel (%p265) target = $region36
      $region35: #{decoder_forward.1} parent=11 // pred_region
        _
      $region36: #{decoder_forward.1} parent=11 // pred_fallthru
        _
      // Predicated region
      $region37: #{decoder_forward.1} parent=11 // pred_check
        %p268 = pneg %p188
      $region38: #{decoder_forward.1} parent=11 // pred_check_branch
        %270 = sbr.rel (%p268) target = $region40
      $region39: #{decoder_forward.1} parent=11 // pred_region
        _
      $region40: #{decoder_forward.1} parent=11 // pred_fallthru
        _
      // Predicated region
      $region41: #{decoder_forward.1} parent=11 // pred_check
        %p271 = pneg %p209
      $region42: #{decoder_forward.1} parent=11 // pred_check_branch
        %273 = sbr.rel (%p271) target = $region44
      $region43: #{decoder_forward.1} parent=11 // pred_region
        _
      $region44: #{decoder_forward.1} parent=11 // pred_fallthru
        _
    $region12: #{decoder_forward.1} parent=5 // pred_fallthru
      _
    %p274 = scmp.lt.s32.totalorder %s15, 2
    // Predicated region
    $region45: #{decoder_forward.1} parent=5 // pred_check
      %p275 = pneg %p274
    $region46: #{decoder_forward.1} parent=5 // pred_check_branch
      %277 = sbr.rel (%p275) target = $region48
    $region47: #{decoder_forward.1} parent=5 // pred_region
      // Predicated region
      $region49: #{decoder_forward.1} parent=47 // pred_check
        %p278 = pneg %p35
      $region50: #{decoder_forward.1} parent=47 // pred_check_branch
        %280 = sbr.rel (%p278) target = $region52
      $region51: #{decoder_forward.1} parent=47 // pred_region
        %p281 = scmp.lt.s32.totalorder %s15, 1
        %s282 = scalar_select %p281, %s15, 1
        %s283 = smul.addr %s282, 28
        %s284 = smul.addr %s283, 4
        %s285 = scalar_lea.vmem %s0, %s284
      $region52: #{decoder_forward.1} parent=47 // pred_fallthru
        _
    $region48: #{decoder_forward.1} parent=5 // pred_fallthru
      _
    %p286 = scmp.le.s32.totalorder 1, %s15
    %p287 = scmp.lt.s32.totalorder %s15, 3
    %p288 = pnand %p286, %p287
    %p289 = pneg %p288
    // Predicated region
    $region53: #{decoder_forward.1} parent=5 // pred_check
      _
    $region54: #{decoder_forward.1} parent=5 // pred_check_branch
      %291 = sbr.rel (%p288) target = $region56
    $region55: #{decoder_forward.1} parent=5 // pred_region
      %s292 = ssub.s32 %s15, 1
      %p293 = scmp.lt.s32.totalorder %s20, 1
      %s294 = scalar_select %p293, %s20, 1
      %s295 = smul.addr %s294, 28
      %s296 = smul.addr %s295, 4
      %s297 = scalar_lea.vmem %s0, %s296
      %p298 = pneg %p41
      %p299 = pneg %p38
      %p300 = pneg %p62
      %p301 = pneg %p59
      %p302 = pneg %p83
      %p303 = pneg %p80
      %p304 = pneg %p104
      %p305 = pneg %p101
      %p306 = pneg %p125
      %p307 = pneg %p122
      %p308 = pneg %p146
      %p309 = pneg %p143
      %p310 = pneg %p167
      %p311 = pneg %p164
      %p312 = pneg %p188
      %p313 = pneg %p185
      %p314 = pneg %p209
      %p315 = pneg %p206
      %p316 = pneg %p235
      %p317 = pneg %p232
      %p318 = scmp.lt.s32.totalorder %s20, 1
      %s319 = scalar_select %p318, %s20, 1
      %s320 = smul.addr %s319, 2
      %s321 = smul.addr %s320, 8
      %s322 = scalar_lea.vmem %s9, %s321
      %p323 = scmp.lt.s32.totalorder %s20, 1
      %s324 = scalar_select %p323, %s20, 1
      %s325 = smul.addr %s324, 28
      %s326 = smul.addr %s325, 4
      %s327 = scalar_lea.vmem %s0, %s326
      %p328 = scmp.lt.s32.totalorder %s20, 1
      %s329 = scalar_select %p328, %s20, 1
      %s330 = smul.addr %s329, 2
      %s331 = smul.addr %s330, 8
      %s332 = scalar_lea.vmem %s9, %s331
      %v334 = vld [vmem:[%s327] sm:$0xff]
      %v335 = vld [vmem:[%s327 + $0x8] sm:$0xff]
      %v336 = vld [vmem:[%s327 + $0x10] sm:$0xff]
      %v337 = vld [vmem:[%s327 + $0x18] sm:$0xff]
      %v338 = vld [vmem:[%s327 + $0x20] sm:$0xff]
      %v339 = vld [vmem:[%s327 + $0x28] sm:$0xff]
      %v340 = vld [vmem:[%s327 + $0x30] sm:$0xff]
      %v341 = vld [vmem:[%s327 + $0x38] sm:$0xff]
      %v342 = vld [vmem:[%s327 + $0x40] sm:$0xff]
      %v343 = vld [vmem:[%s327 + $0x48] sm:$0xff]
      %v344 = vld [vmem:[%s327 + $0x50] sm:$0xff]
      %v345 = vld [vmem:[%s327 + $0x58] sm:$0xff]
      %v346 = vld [vmem:[%s327 + $0x60] sm:$0xff]
      %v347 = vld [vmem:[%s327 + $0x68] sm:$0xff]
      %v348 = vld [vmem:[%s1] sm:$0xf]
      %v349 = vld [vmem:[%s1 + $0x4] sm:$0xf]
      %v350 = vld [vmem:[%s1 + $0x8] sm:$0xf]
      %v351 = vld [vmem:[%s1 + $0xc] sm:$0xf]
      %v352 = vld [vmem:[%s1 + $0x10] sm:$0xf]
      %v353 = vld [vmem:[%s1 + $0x14] sm:$0xf]
      %v354 = vld [vmem:[%s1 + $0x18] sm:$0xf]
      %v355 = vld [vmem:[%s1 + $0x1c] sm:$0xf]
      %v356 = vld [vmem:[%s1 + $0x20] sm:$0xf]
      %v357 = vld [vmem:[%s1 + $0x24] sm:$0xf]
      %v358 = vld [vmem:[%s1 + $0x28] sm:$0xf]
      %v359 = vld [vmem:[%s1 + $0x2c] sm:$0xf]
      %v360 = vld [vmem:[%s1 + $0x30] sm:$0xf]
      %v361 = vld [vmem:[%s1 + $0x34] sm:$0xf]
      %v362 = vld [vmem:[%s1 + $0x38] sm:$0xf]
      %v363 = vld [vmem:[%s1 + $0x3c] sm:$0xf]
      %v364 = vld [vmem:[%s1 + $0x40] sm:$0xf]
      %v365 = vld [vmem:[%s1 + $0x44] sm:$0xf]
      %v366 = vld [vmem:[%s1 + $0x48] sm:$0xf]
      %v367 = vld [vmem:[%s1 + $0x4c] sm:$0xf]
      %v368 = vld [vmem:[%s1 + $0x50] sm:$0xf]
      %v369 = vld [vmem:[%s1 + $0x54] sm:$0xf]
      %v370 = vld [vmem:[%s1 + $0x58] sm:$0xf]
      %v371 = vld [vmem:[%s1 + $0x5c] sm:$0xf]
      %v372 = vld [vmem:[%s1 + $0x60] sm:$0xf]
      %v373 = vld [vmem:[%s1 + $0x64] sm:$0xf]
      %v374 = vld [vmem:[%s1 + $0x68] sm:$0xf]
      %v375 = vld [vmem:[%s1 + $0x6c] sm:$0xf]
      %v376 = vld [vmem:[%s1 + $0x70] sm:$0xf]
      %v377 = vld [vmem:[%s1 + $0x74] sm:$0xf]
      %v378 = vld [vmem:[%s1 + $0x78] sm:$0xf]
      %v379 = vld [vmem:[%s1 + $0x7c] sm:$0xf]
      %v412 = vunpack.c.l.b16 %v348
      %v413 = vunpack.c.l.b16 %v349
      %v414 = vunpack.c.l.b16 %v350
      %v415 = vunpack.c.l.b16 %v351
      %v416 = vunpack.c.l.b16 %v352
      %v417 = vunpack.c.l.b16 %v353
      %v418 = vunpack.c.l.b16 %v354
      %v419 = vunpack.c.l.b16 %v355
      %v420 = vunpack.c.l.b16 %v356
      %v421 = vunpack.c.l.b16 %v357
      %v422 = vunpack.c.l.b16 %v358
      %v423 = vunpack.c.l.b16 %v359
      %v424 = vunpack.c.l.b16 %v360
      %v425 = vunpack.c.l.b16 %v361
      %v426 = vunpack.c.l.b16 %v362
      %v427 = vunpack.c.l.b16 %v363
      %v428 = vunpack.c.l.b16 %v364
      %v429 = vunpack.c.l.b16 %v365
      %v430 = vunpack.c.l.b16 %v366
      %v431 = vunpack.c.l.b16 %v367
      %v432 = vunpack.c.l.b16 %v368
      %v433 = vunpack.c.l.b16 %v369
      %v434 = vunpack.c.l.b16 %v370
      %v435 = vunpack.c.l.b16 %v371
      %v436 = vunpack.c.l.b16 %v372
      %v437 = vunpack.c.l.b16 %v373
      %v438 = vunpack.c.l.b16 %v374
      %v439 = vunpack.c.l.b16 %v375
      %v440 = vunpack.c.l.b16 %v376
      %v441 = vunpack.c.l.b16 %v377
      %v442 = vunpack.c.l.b16 %v378
      %v443 = vunpack.c.l.b16 %v379
      %v444 = vpack.c.b16 %v413, %v412
      %v445 = vpack.c.b16 %v415, %v414
      %v446 = vpack.c.b16 %v417, %v416
      %v447 = vpack.c.b16 %v419, %v418
      %v448 = vpack.c.b16 %v421, %v420
      %v449 = vpack.c.b16 %v423, %v422
      %v450 = vpack.c.b16 %v425, %v424
      %v451 = vpack.c.b16 %v427, %v426
      %v452 = vpack.c.b16 %v429, %v428
      %v453 = vpack.c.b16 %v431, %v430
      %v454 = vpack.c.b16 %v433, %v432
      %v455 = vpack.c.b16 %v435, %v434
      %v456 = vpack.c.b16 %v437, %v436
      %v457 = vpack.c.b16 %v439, %v438
      %v458 = vpack.c.b16 %v441, %v440
      %v459 = vpack.c.b16 %v443, %v442
      %v474 = vunpack.c.l.b16 %v334
      %v475 = vunpack.c.h.b16 %v334
      %v476 = vunpack.c.l.b16 %v335
      %v477 = vunpack.c.h.b16 %v335
      %v478 = vunpack.c.l.b16 %v336
      %v479 = vunpack.c.h.b16 %v336
      %v480 = vunpack.c.l.b16 %v337
      %v481 = vunpack.c.h.b16 %v337
      %v482 = vunpack.c.l.b16 %v338
      %v483 = vunpack.c.h.b16 %v338
      %v484 = vunpack.c.l.b16 %v339
      %v485 = vunpack.c.h.b16 %v339
      %v486 = vunpack.c.l.b16 %v340
      %v487 = vunpack.c.h.b16 %v340
      %v488 = vunpack.c.l.b16 %v341
      %v489 = vunpack.c.h.b16 %v341
      %v490 = vunpack.c.l.b16 %v342
      %v491 = vunpack.c.h.b16 %v342
      %v492 = vunpack.c.l.b16 %v343
      %v493 = vunpack.c.h.b16 %v343
      %v494 = vunpack.c.l.b16 %v344
      %v495 = vunpack.c.h.b16 %v344
      %v496 = vunpack.c.l.b16 %v345
      %v497 = vunpack.c.h.b16 %v345
      %v498 = vunpack.c.l.b16 %v346
      %v499 = vunpack.c.h.b16 %v346
      %v500 = vunpack.c.l.b16 %v347
      %v501 = vunpack.c.h.b16 %v347
      %v502 = vpack.c.b16 %v476, %v474
      %v503 = vpack.c.b16 %v477, %v475
      %v504 = vpack.c.b16 %v480, %v478
      %v505 = vpack.c.b16 %v481, %v479
      %v506 = vpack.c.b16 %v484, %v482
      %v507 = vpack.c.b16 %v485, %v483
      %v508 = vpack.c.b16 %v488, %v486
      %v509 = vpack.c.b16 %v489, %v487
      %v510 = vpack.c.b16 %v492, %v490
      %v511 = vpack.c.b16 %v493, %v491
      %v512 = vpack.c.b16 %v496, %v494
      %v513 = vpack.c.b16 %v497, %v495
      %v514 = vpack.c.b16 %v500, %v498
      %v515 = vpack.c.b16 %v501, %v499
      %vm530 = vcmask 916480
      %v532 = vsel %vm530, %v444, 0
      %v535 = vsel %vm530, %v445, 0
      %v538 = vsel %vm530, %v446, 0
      %v541 = vsel %vm530, %v447, 0
      %v544 = vsel %vm530, %v448, 0
      %v547 = vsel %vm530, %v449, 0
      %v550 = vsel %vm530, %v450, 0
      %v553 = vsel %vm530, %v451, 0
      %v556 = vsel %vm530, %v452, 0
      %v559 = vsel %vm530, %v453, 0
      %v562 = vsel %vm530, %v454, 0
      %v565 = vsel %vm530, %v455, 0
      %v568 = vsel %vm530, %v456, 0
      %v571 = vsel %vm530, %v457, 0
      %v574 = vsel %vm530, %v458, 0
      %v577 = vsel %vm530, %v459, 0
      %579 = vmatprep.subr.bf16.mxu0 0
      %580 = vmatpush1.bf16.msra.mxu0 0
      %581 = vmatprep.subr.bf16.mxu0 %v515
      %582 = vmatpush1.bf16.msra.mxu0 %v514
      %583 = vmatprep.subr.bf16.mxu0 %v513
      %584 = vmatpush1.bf16.msra.mxu0 %v512
      %585 = vmatprep.subr.bf16.mxu0 %v511
      %586 = vmatpush1.bf16.msra.mxu0 %v510
      %587 = vmatprep.subr.bf16.mxu0 %v509
      %588 = vmatpush1.bf16.msra.mxu0 %v508
      %589 = vmatprep.subr.bf16.mxu0 %v507
      %590 = vmatpush1.bf16.msra.mxu0 %v506
      %591 = vmatprep.subr.bf16.mxu0 %v505
      %592 = vmatpush1.bf16.msra.mxu0 %v504
      %593 = vmatprep.subr.bf16.mxu0 %v503
      %594 = vmatpush1.bf16.msra.mxu0 %v502
      %595 = vmatprep.subr.bf16.mxu0 0
      %596 = vmatpush2.bf16.msra.mxu0 0
      %597 = vmatprep.subr.bf16.mxu0 0
      %598 = vmatpush2.bf16.msra.mxu0 0
      %599 = vmatprep.subr.bf16.mxu0 0
      %600 = vmatpush2.bf16.msra.mxu0 0
      %601 = vmatprep.subr.bf16.mxu0 0
      %602 = vmatpush2.bf16.msra.mxu0 0
      %603 = vmatprep.subr.bf16.mxu0 0
      %604 = vmatpush2.bf16.msra.mxu0 0
      %605 = vmatprep.subr.bf16.mxu0 0
      %606 = vmatpush2.bf16.msra.mxu0 0
      %607 = vmatprep.subr.bf16.mxu0 0
      %608 = vmatpush2.bf16.msra.mxu0 0
      %609 = vmatprep.subr.bf16.mxu0 0
      %610 = vmatpush2.bf16.msra.mxu0 0
      %611 = vmatprep.mubr.bf16.mxu0 0
      %612 = vmatmul.mubr.bf16.gmra.mxu0 %v532
      %v613 = vpop.f32.mrf.mxu0
      %v614 = vadd.f32 0.0, %v613
      %v615 = vpop.f32.mrf.mxu0
      %v616 = vadd.f32 0.0, %v615
      %v617 = vpop.f32.mrf.mxu0
      %v618 = vadd.f32 0.0, %v617
      %v619 = vpop.f32.mrf.mxu0
      %v620 = vadd.f32 0.0, %v619
      %621 = vmatprep.mubr.bf16.mxu0 0
      %622 = vmatmul.mubr.bf16.gmra.mxu0 %v535
      %v623 = vpop.f32.mrf.mxu0
      %v624 = vadd.f32 0.0, %v623
      %v625 = vpop.f32.mrf.mxu0
      %v626 = vadd.f32 0.0, %v625
      %v627 = vpop.f32.mrf.mxu0
      %v628 = vadd.f32 0.0, %v627
      %v629 = vpop.f32.mrf.mxu0
      %v630 = vadd.f32 0.0, %v629
      %631 = vmatprep.mubr.bf16.mxu0 0
      %632 = vmatmul.mubr.bf16.gmra.mxu0 %v538
      %v633 = vpop.f32.mrf.mxu0
      %v634 = vadd.f32 0.0, %v633
      %v635 = vpop.f32.mrf.mxu0
      %v636 = vadd.f32 0.0, %v635
      %v637 = vpop.f32.mrf.mxu0
      %v638 = vadd.f32 0.0, %v637
      %v639 = vpop.f32.mrf.mxu0
      %v640 = vadd.f32 0.0, %v639
      %641 = vmatprep.mubr.bf16.mxu0 0
      %642 = vmatmul.mubr.bf16.gmra.mxu0 %v541
      %v643 = vpop.f32.mrf.mxu0
      %v644 = vadd.f32 0.0, %v643
      %v645 = vpop.f32.mrf.mxu0
      %v646 = vadd.f32 0.0, %v645
      %v647 = vpop.f32.mrf.mxu0
      %v648 = vadd.f32 0.0, %v647
      %v649 = vpop.f32.mrf.mxu0
      %v650 = vadd.f32 0.0, %v649
      %651 = vmatprep.mubr.bf16.mxu0 0
      %652 = vmatmul.mubr.bf16.gmra.mxu0 %v544
      %v653 = vpop.f32.mrf.mxu0
      %v654 = vadd.f32 0.0, %v653
      %v655 = vpop.f32.mrf.mxu0
      %v656 = vadd.f32 0.0, %v655
      %v657 = vpop.f32.mrf.mxu0
      %v658 = vadd.f32 0.0, %v657
      %v659 = vpop.f32.mrf.mxu0
      %v660 = vadd.f32 0.0, %v659
      %661 = vmatprep.mubr.bf16.mxu0 0
      %662 = vmatmul.mubr.bf16.gmra.mxu0 %v547
      %v663 = vpop.f32.mrf.mxu0
      %v664 = vadd.f32 0.0, %v663
      %v665 = vpop.f32.mrf.mxu0
      %v666 = vadd.f32 0.0, %v665
      %v667 = vpop.f32.mrf.mxu0
      %v668 = vadd.f32 0.0, %v667
      %v669 = vpop.f32.mrf.mxu0
      %v670 = vadd.f32 0.0, %v669
      %671 = vmatprep.mubr.bf16.mxu0 0
      %672 = vmatmul.mubr.bf16.gmra.mxu0 %v550
      %v673 = vpop.f32.mrf.mxu0
      %v674 = vadd.f32 0.0, %v673
      %v675 = vpop.f32.mrf.mxu0
      %v676 = vadd.f32 0.0, %v675
      %v677 = vpop.f32.mrf.mxu0
      %v678 = vadd.f32 0.0, %v677
      %v679 = vpop.f32.mrf.mxu0
      %v680 = vadd.f32 0.0, %v679
      %681 = vmatprep.mubr.bf16.mxu0 0
      %682 = vmatmul.mubr.bf16.gmra.mxu0 %v553
      %v683 = vpop.f32.mrf.mxu0
      %v684 = vadd.f32 0.0, %v683
      %v685 = vpop.f32.mrf.mxu0
      %v686 = vadd.f32 0.0, %v685
      %v687 = vpop.f32.mrf.mxu0
      %v688 = vadd.f32 0.0, %v687
      %v689 = vpop.f32.mrf.mxu0
      %v690 = vadd.f32 0.0, %v689
      %691 = vmatprep.mubr.bf16.mxu0 0
      %692 = vmatmul.mubr.bf16.gmra.mxu0 %v556
      %v693 = vpop.f32.mrf.mxu0
      %v694 = vadd.f32 0.0, %v693
      %v695 = vpop.f32.mrf.mxu0
      %v696 = vadd.f32 0.0, %v695
      %v697 = vpop.f32.mrf.mxu0
      %v698 = vadd.f32 0.0, %v697
      %v699 = vpop.f32.mrf.mxu0
      %v700 = vadd.f32 0.0, %v699
      %701 = vmatprep.mubr.bf16.mxu0 0
      %702 = vmatmul.mubr.bf16.gmra.mxu0 %v559
      %v703 = vpop.f32.mrf.mxu0
      %v704 = vadd.f32 0.0, %v703
      %v705 = vpop.f32.mrf.mxu0
      %v706 = vadd.f32 0.0, %v705
      %v707 = vpop.f32.mrf.mxu0
      %v708 = vadd.f32 0.0, %v707
      %v709 = vpop.f32.mrf.mxu0
      %v710 = vadd.f32 0.0, %v709
      %711 = vmatprep.mubr.bf16.mxu0 0
      %712 = vmatmul.mubr.bf16.gmra.mxu0 %v562
      %v713 = vpop.f32.mrf.mxu0
      %v714 = vadd.f32 0.0, %v713
      %v715 = vpop.f32.mrf.mxu0
      %v716 = vadd.f32 0.0, %v715
      %v717 = vpop.f32.mrf.mxu0
      %v718 = vadd.f32 0.0, %v717
      %v719 = vpop.f32.mrf.mxu0
      %v720 = vadd.f32 0.0, %v719
      %721 = vmatprep.mubr.bf16.mxu0 0
      %722 = vmatmul.mubr.bf16.gmra.mxu0 %v565
      %v723 = vpop.f32.mrf.mxu0
      %v724 = vadd.f32 0.0, %v723
      %v725 = vpop.f32.mrf.mxu0
      %v726 = vadd.f32 0.0, %v725
      %v727 = vpop.f32.mrf.mxu0
      %v728 = vadd.f32 0.0, %v727
      %v729 = vpop.f32.mrf.mxu0
      %v730 = vadd.f32 0.0, %v729
      %731 = vmatprep.mubr.bf16.mxu0 0
      %732 = vmatmul.mubr.bf16.gmra.mxu0 %v568
      %v733 = vpop.f32.mrf.mxu0
      %v734 = vadd.f32 0.0, %v733
      %v735 = vpop.f32.mrf.mxu0
      %v736 = vadd.f32 0.0, %v735
      %v737 = vpop.f32.mrf.mxu0
      %v738 = vadd.f32 0.0, %v737
      %v739 = vpop.f32.mrf.mxu0
      %v740 = vadd.f32 0.0, %v739
      %741 = vmatprep.mubr.bf16.mxu0 0
      %742 = vmatmul.mubr.bf16.gmra.mxu0 %v571
      %v743 = vpop.f32.mrf.mxu0
      %v744 = vadd.f32 0.0, %v743
      %v745 = vpop.f32.mrf.mxu0
      %v746 = vadd.f32 0.0, %v745
      %v747 = vpop.f32.mrf.mxu0
      %v748 = vadd.f32 0.0, %v747
      %v749 = vpop.f32.mrf.mxu0
      %v750 = vadd.f32 0.0, %v749
      %751 = vmatprep.mubr.bf16.mxu0 0
      %752 = vmatmul.mubr.bf16.gmra.mxu0 %v574
      %v753 = vpop.f32.mrf.mxu0
      %v754 = vadd.f32 0.0, %v753
      %v755 = vpop.f32.mrf.mxu0
      %v756 = vadd.f32 0.0, %v755
      %v757 = vpop.f32.mrf.mxu0
      %v758 = vadd.f32 0.0, %v757
      %v759 = vpop.f32.mrf.mxu0
      %v760 = vadd.f32 0.0, %v759
      %761 = vmatprep.mubr.bf16.mxu0 0
      %762 = vmatmul.mubr.bf16.gmra.mxu0 %v577
      %v763 = vpop.f32.mrf.mxu0
      %v764 = vadd.f32 0.0, %v763
      %v765 = vpop.f32.mrf.mxu0
      %v766 = vadd.f32 0.0, %v765
      %v767 = vpop.f32.mrf.mxu0
      %v768 = vadd.f32 0.0, %v767
      %v769 = vpop.f32.mrf.mxu0
      %v770 = vadd.f32 0.0, %v769
      %771 = vdwg.mxu0
      %v772 = vmax.f32 %v614, 0.0
      %v773 = vmax.f32 %v616, 0.0
      %v774 = vmax.f32 %v618, 0.0
      %v775 = vmax.f32 %v620, 0.0
      %v776 = vmax.f32 %v624, 0.0
      %v777 = vmax.f32 %v626, 0.0
      %v778 = vmax.f32 %v628, 0.0
      %v779 = vmax.f32 %v630, 0.0
      %v780 = vmax.f32 %v634, 0.0
      %v781 = vmax.f32 %v636, 0.0
      %v782 = vmax.f32 %v638, 0.0
      %v783 = vmax.f32 %v640, 0.0
      %v784 = vmax.f32 %v644, 0.0
      %v785 = vmax.f32 %v646, 0.0
      %v786 = vmax.f32 %v648, 0.0
      %v787 = vmax.f32 %v650, 0.0
      %v788 = vmax.f32 %v654, 0.0
      %v789 = vmax.f32 %v656, 0.0
      %v790 = vmax.f32 %v658, 0.0
      %v791 = vmax.f32 %v660, 0.0
      %v792 = vmax.f32 %v664, 0.0
      %v793 = vmax.f32 %v666, 0.0
      %v794 = vmax.f32 %v668, 0.0
      %v795 = vmax.f32 %v670, 0.0
      %v796 = vmax.f32 %v674, 0.0
      %v797 = vmax.f32 %v676, 0.0
      %v798 = vmax.f32 %v678, 0.0
      %v799 = vmax.f32 %v680, 0.0
      %v800 = vmax.f32 %v684, 0.0
      %v801 = vmax.f32 %v686, 0.0
      %v802 = vmax.f32 %v688, 0.0
      %v803 = vmax.f32 %v690, 0.0
      %v804 = vmax.f32 %v694, 0.0
      %v805 = vmax.f32 %v696, 0.0
      %v806 = vmax.f32 %v698, 0.0
      %v807 = vmax.f32 %v700, 0.0
      %v808 = vmax.f32 %v704, 0.0
      %v809 = vmax.f32 %v706, 0.0
      %v810 = vmax.f32 %v708, 0.0
      %v811 = vmax.f32 %v710, 0.0
      %v812 = vmax.f32 %v714, 0.0
      %v813 = vmax.f32 %v716, 0.0
      %v814 = vmax.f32 %v718, 0.0
      %v815 = vmax.f32 %v720, 0.0
      %v816 = vmax.f32 %v724, 0.0
      %v817 = vmax.f32 %v726, 0.0
      %v818 = vmax.f32 %v728, 0.0
      %v819 = vmax.f32 %v730, 0.0
      %v820 = vmax.f32 %v734, 0.0
      %v821 = vmax.f32 %v736, 0.0
      %v822 = vmax.f32 %v738, 0.0
      %v823 = vmax.f32 %v740, 0.0
      %v824 = vmax.f32 %v744, 0.0
      %v825 = vmax.f32 %v746, 0.0
      %v826 = vmax.f32 %v748, 0.0
      %v827 = vmax.f32 %v750, 0.0
      %v828 = vmax.f32 %v754, 0.0
      %v829 = vmax.f32 %v756, 0.0
      %v830 = vmax.f32 %v758, 0.0
      %v831 = vmax.f32 %v760, 0.0
      %v832 = vmax.f32 %v764, 0.0
      %v833 = vmax.f32 %v766, 0.0
      %v834 = vmax.f32 %v768, 0.0
      %v835 = vmax.f32 %v770, 0.0
      %v836 = vpack.c.bf16 %v774, %v772
      %v837 = vpack.c.bf16 %v775, %v773
      %v838 = vpack.c.bf16 %v778, %v776
      %v839 = vpack.c.bf16 %v779, %v777
      %v840 = vpack.c.bf16 %v782, %v780
      %v841 = vpack.c.bf16 %v783, %v781
      %v842 = vpack.c.bf16 %v786, %v784
      %v843 = vpack.c.bf16 %v787, %v785
      %v844 = vpack.c.bf16 %v790, %v788
      %v845 = vpack.c.bf16 %v791, %v789
      %v846 = vpack.c.bf16 %v794, %v792
      %v847 = vpack.c.bf16 %v795, %v793
      %v848 = vpack.c.bf16 %v798, %v796
      %v849 = vpack.c.bf16 %v799, %v797
      %v850 = vpack.c.bf16 %v802, %v800
      %v851 = vpack.c.bf16 %v803, %v801
      %v852 = vpack.c.bf16 %v806, %v804
      %v853 = vpack.c.bf16 %v807, %v805
      %v854 = vpack.c.bf16 %v810, %v808
      %v855 = vpack.c.bf16 %v811, %v809
      %v856 = vpack.c.bf16 %v814, %v812
      %v857 = vpack.c.bf16 %v815, %v813
      %v858 = vpack.c.bf16 %v818, %v816
      %v859 = vpack.c.bf16 %v819, %v817
      %v860 = vpack.c.bf16 %v822, %v820
      %v861 = vpack.c.bf16 %v823, %v821
      %v862 = vpack.c.bf16 %v826, %v824
      %v863 = vpack.c.bf16 %v827, %v825
      %v864 = vpack.c.bf16 %v830, %v828
      %v865 = vpack.c.bf16 %v831, %v829
      %v866 = vpack.c.bf16 %v834, %v832
      %v867 = vpack.c.bf16 %v835, %v833
      %v868 = vld [vmem:[%s2] sm:$0xf]
      %v869 = vld [vmem:[%s2 + $0x4] sm:$0xf]
      %v870 = vld [vmem:[%s2 + $0x8] sm:$0xf]
      %v871 = vld [vmem:[%s2 + $0xc] sm:$0xf]
      %v872 = vld [vmem:[%s2 + $0x10] sm:$0xf]
      %v873 = vld [vmem:[%s2 + $0x14] sm:$0xf]
      %v874 = vld [vmem:[%s2 + $0x18] sm:$0xf]
      %v875 = vld [vmem:[%s2 + $0x1c] sm:$0xf]
      %v876 = vld [vmem:[%s2 + $0x20] sm:$0xf]
      %v877 = vld [vmem:[%s2 + $0x24] sm:$0xf]
      %v878 = vld [vmem:[%s2 + $0x28] sm:$0xf]
      %v879 = vld [vmem:[%s2 + $0x2c] sm:$0xf]
      %v880 = vld [vmem:[%s2 + $0x30] sm:$0xf]
      %v881 = vld [vmem:[%s2 + $0x34] sm:$0xf]
      %v882 = vld [vmem:[%s2 + $0x38] sm:$0xf]
      %v883 = vld [vmem:[%s2 + $0x3c] sm:$0xf]
      %v884 = vld [vmem:[%s3] sm:$0xff]
      %v885 = vld [vmem:[%s3 + $0x8] sm:$0xff]
      %v886 = vld [vmem:[%s3 + $0x10] sm:$0xff]
      %v887 = vld [vmem:[%s3 + $0x18] sm:$0xff]
      %v888 = vld [vmem:[%s3 + $0x20] sm:$0xff]
      %v889 = vld [vmem:[%s3 + $0x28] sm:$0xff]
      %v890 = vld [vmem:[%s3 + $0x30] sm:$0xff]
      %v891 = vld [vmem:[%s3 + $0x38] sm:$0xff]
      %v892 = vld [vmem:[%s3 + $0x40] sm:$0xff]
      %v893 = vld [vmem:[%s3 + $0x48] sm:$0xff]
      %v894 = vld [vmem:[%s3 + $0x50] sm:$0xff]
      %v895 = vld [vmem:[%s3 + $0x58] sm:$0xff]
      %v896 = vld [vmem:[%s3 + $0x60] sm:$0xff]
      %v897 = vld [vmem:[%s3 + $0x68] sm:$0xff]
      %v898 = vld [vmem:[%s3 + $0x70] sm:$0xff]
      %v899 = vld [vmem:[%s3 + $0x78] sm:$0xff]
      %901 = vset.pattern.permute.xlu0 0
      %902 = vperm.xlu0 %901, %v884
      %v903 = vpop.permute.xlu0 %902
      %906 = vset.pattern.permute.xlu0 0
      %907 = vperm.xlu0 %906, %v885
      %v908 = vpop.permute.xlu0 %907
      %911 = vset.pattern.permute.xlu0 0
      %912 = vperm.xlu0 %911, %v886
      %v913 = vpop.permute.xlu0 %912
      %916 = vset.pattern.permute.xlu0 0
      %917 = vperm.xlu0 %916, %v887
      %v918 = vpop.permute.xlu0 %917
      %921 = vset.pattern.permute.xlu0 0
      %922 = vperm.xlu0 %921, %v888
      %v923 = vpop.permute.xlu0 %922
      %926 = vset.pattern.permute.xlu0 0
      %927 = vperm.xlu0 %926, %v889
      %v928 = vpop.permute.xlu0 %927
      %931 = vset.pattern.permute.xlu0 0
      %932 = vperm.xlu0 %931, %v890
      %v933 = vpop.permute.xlu0 %932
      %936 = vset.pattern.permute.xlu0 0
      %937 = vperm.xlu0 %936, %v891
      %v938 = vpop.permute.xlu0 %937
      %941 = vset.pattern.permute.xlu0 0
      %942 = vperm.xlu0 %941, %v892
      %v943 = vpop.permute.xlu0 %942
      %946 = vset.pattern.permute.xlu0 0
      %947 = vperm.xlu0 %946, %v893
      %v948 = vpop.permute.xlu0 %947
      %951 = vset.pattern.permute.xlu0 0
      %952 = vperm.xlu0 %951, %v894
      %v953 = vpop.permute.xlu0 %952
      %956 = vset.pattern.permute.xlu0 0
      %957 = vperm.xlu0 %956, %v895
      %v958 = vpop.permute.xlu0 %957
      %961 = vset.pattern.permute.xlu0 0
      %962 = vperm.xlu0 %961, %v896
      %v963 = vpop.permute.xlu0 %962
      %966 = vset.pattern.permute.xlu0 0
      %967 = vperm.xlu0 %966, %v897
      %v968 = vpop.permute.xlu0 %967
      %971 = vset.pattern.permute.xlu0 0
      %972 = vperm.xlu0 %971, %v898
      %v973 = vpop.permute.xlu0 %972
      %976 = vset.pattern.permute.xlu0 0
      %977 = vperm.xlu0 %976, %v899
      %v978 = vpop.permute.xlu0 %977
      %v996 = vunpack.c.l.b16 %v868
      %v997 = vunpack.c.l.b16 %v869
      %v998 = vunpack.c.l.b16 %v870
      %v999 = vunpack.c.l.b16 %v871
      %v1000 = vunpack.c.l.b16 %v872
      %v1001 = vunpack.c.l.b16 %v873
      %v1002 = vunpack.c.l.b16 %v874
      %v1003 = vunpack.c.l.b16 %v875
      %v1004 = vunpack.c.l.b16 %v876
      %v1005 = vunpack.c.l.b16 %v877
      %v1006 = vunpack.c.l.b16 %v878
      %v1007 = vunpack.c.l.b16 %v879
      %v1008 = vunpack.c.l.b16 %v880
      %v1009 = vunpack.c.l.b16 %v881
      %v1010 = vunpack.c.l.b16 %v882
      %v1011 = vunpack.c.l.b16 %v883
      %v1012 = vpack.c.b16 %v997, %v996
      %v1013 = vpack.c.b16 %v999, %v998
      %v1014 = vpack.c.b16 %v1001, %v1000
      %v1015 = vpack.c.b16 %v1003, %v1002
      %v1016 = vpack.c.b16 %v1005, %v1004
      %v1017 = vpack.c.b16 %v1007, %v1006
      %v1018 = vpack.c.b16 %v1009, %v1008
      %v1019 = vpack.c.b16 %v1011, %v1010
      %1028 = vmatprep.subr.bf16.mxu0 %v851
      %1029 = vmatpush1.bf16.msra.mxu0 %v850
      %1030 = vmatprep.subr.bf16.mxu0 %v849
      %1031 = vmatpush1.bf16.msra.mxu0 %v848
      %1032 = vmatprep.subr.bf16.mxu0 %v847
      %1033 = vmatpush1.bf16.msra.mxu0 %v846
      %1034 = vmatprep.subr.bf16.mxu0 %v845
      %1035 = vmatpush1.bf16.msra.mxu0 %v844
      %1036 = vmatprep.subr.bf16.mxu0 %v843
      %1037 = vmatpush1.bf16.msra.mxu0 %v842
      %1038 = vmatprep.subr.bf16.mxu0 %v841
      %1039 = vmatpush1.bf16.msra.mxu0 %v840
      %1040 = vmatprep.subr.bf16.mxu0 %v839
      %1041 = vmatpush1.bf16.msra.mxu0 %v838
      %1042 = vmatprep.subr.bf16.mxu0 %v837
      %1043 = vmatpush1.bf16.msra.mxu0 %v836
      %1044 = vmatprep.subr.bf16.mxu0 0
      %1045 = vmatpush2.bf16.msra.mxu0 0
      %1046 = vmatprep.subr.bf16.mxu0 0
      %1047 = vmatpush2.bf16.msra.mxu0 0
      %1048 = vmatprep.subr.bf16.mxu0 0
      %1049 = vmatpush2.bf16.msra.mxu0 0
      %1050 = vmatprep.subr.bf16.mxu0 0
      %1051 = vmatpush2.bf16.msra.mxu0 0
      %1052 = vmatprep.subr.bf16.mxu0 0
      %1053 = vmatpush2.bf16.msra.mxu0 0
      %1054 = vmatprep.subr.bf16.mxu0 0
      %1055 = vmatpush2.bf16.msra.mxu0 0
      %1056 = vmatprep.subr.bf16.mxu0 0
      %1057 = vmatpush2.bf16.msra.mxu0 0
      %1058 = vmatprep.subr.bf16.mxu0 0
      %1059 = vmatpush2.bf16.msra.mxu0 0
      %1060 = vmatprep.mubr.bf16.mxu0 0
      %1061 = vmatmul.mubr.bf16.gmra.mxu0 %v1012
      %v1062 = vpop.f32.mrf.mxu0
      %v1063 = vadd.f32 %v903, %v1062
      %v1064 = vpop.f32.mrf.mxu0
      %v1065 = vadd.f32 %v903, %v1064
      %v1066 = vpop.f32.mrf.mxu0
      %v1067 = vadd.f32 %v908, %v1066
      %v1068 = vpop.f32.mrf.mxu0
      %v1069 = vadd.f32 %v908, %v1068
      %1070 = vmatprep.mubr.bf16.mxu0 0
      %1071 = vmatmul.mubr.bf16.gmra.mxu0 %v1013
      %v1072 = vpop.f32.mrf.mxu0
      %v1073 = vadd.f32 %v913, %v1072
      %v1074 = vpop.f32.mrf.mxu0
      %v1075 = vadd.f32 %v913, %v1074
      %v1076 = vpop.f32.mrf.mxu0
      %v1077 = vadd.f32 %v918, %v1076
      %v1078 = vpop.f32.mrf.mxu0
      %v1079 = vadd.f32 %v918, %v1078
      %1080 = vmatprep.mubr.bf16.mxu0 0
      %1081 = vmatmul.mubr.bf16.gmra.mxu0 %v1014
      %v1082 = vpop.f32.mrf.mxu0
      %v1083 = vadd.f32 %v923, %v1082
      %v1084 = vpop.f32.mrf.mxu0
      %v1085 = vadd.f32 %v923, %v1084
      %v1086 = vpop.f32.mrf.mxu0
      %v1087 = vadd.f32 %v928, %v1086
      %v1088 = vpop.f32.mrf.mxu0
      %v1089 = vadd.f32 %v928, %v1088
      %1090 = vmatprep.mubr.bf16.mxu0 0
      %1091 = vmatmul.mubr.bf16.gmra.mxu0 %v1015
      %v1092 = vpop.f32.mrf.mxu0
      %v1093 = vadd.f32 %v933, %v1092
      %v1094 = vpop.f32.mrf.mxu0
      %v1095 = vadd.f32 %v933, %v1094
      %v1096 = vpop.f32.mrf.mxu0
      %v1097 = vadd.f32 %v938, %v1096
      %v1098 = vpop.f32.mrf.mxu0
      %v1099 = vadd.f32 %v938, %v1098
      %1100 = vmatprep.mubr.bf16.mxu0 0
      %1101 = vmatmul.mubr.bf16.gmra.mxu0 %v1016
      %v1102 = vpop.f32.mrf.mxu0
      %v1103 = vadd.f32 %v943, %v1102
      %v1104 = vpop.f32.mrf.mxu0
      %v1105 = vadd.f32 %v943, %v1104
      %v1106 = vpop.f32.mrf.mxu0
      %v1107 = vadd.f32 %v948, %v1106
      %v1108 = vpop.f32.mrf.mxu0
      %v1109 = vadd.f32 %v948, %v1108
      %1110 = vmatprep.mubr.bf16.mxu0 0
      %1111 = vmatmul.mubr.bf16.gmra.mxu0 %v1017
      %v1112 = vpop.f32.mrf.mxu0
      %v1113 = vadd.f32 %v953, %v1112
      %v1114 = vpop.f32.mrf.mxu0
      %v1115 = vadd.f32 %v953, %v1114
      %v1116 = vpop.f32.mrf.mxu0
      %v1117 = vadd.f32 %v958, %v1116
      %v1118 = vpop.f32.mrf.mxu0
      %v1119 = vadd.f32 %v958, %v1118
      %1120 = vmatprep.mubr.bf16.mxu0 0
      %1121 = vmatmul.mubr.bf16.gmra.mxu0 %v1018
      %v1122 = vpop.f32.mrf.mxu0
      %v1123 = vadd.f32 %v963, %v1122
      %v1124 = vpop.f32.mrf.mxu0
      %v1125 = vadd.f32 %v963, %v1124
      %v1126 = vpop.f32.mrf.mxu0
      %v1127 = vadd.f32 %v968, %v1126
      %v1128 = vpop.f32.mrf.mxu0
      %v1129 = vadd.f32 %v968, %v1128
      %1130 = vmatprep.mubr.bf16.mxu0 0
      %1131 = vmatmul.mubr.bf16.gmra.mxu0 %v1019
      %v1132 = vpop.f32.mrf.mxu0
      %v1133 = vadd.f32 %v973, %v1132
      %v1134 = vpop.f32.mrf.mxu0
      %v1135 = vadd.f32 %v973, %v1134
      %v1136 = vpop.f32.mrf.mxu0
      %v1137 = vadd.f32 %v978, %v1136
      %v1138 = vpop.f32.mrf.mxu0
      %v1139 = vadd.f32 %v978, %v1138
      %1140 = vdwg.mxu0
      %v1141 = vmax.f32 %v1063, 0.0
      %v1142 = vmax.f32 %v1065, 0.0
      %v1143 = vmax.f32 %v1067, 0.0
      %v1144 = vmax.f32 %v1069, 0.0
      %v1145 = vmax.f32 %v1073, 0.0
      %v1146 = vmax.f32 %v1075, 0.0
      %v1147 = vmax.f32 %v1077, 0.0
      %v1148 = vmax.f32 %v1079, 0.0
      %v1149 = vmax.f32 %v1083, 0.0
      %v1150 = vmax.f32 %v1085, 0.0
      %v1151 = vmax.f32 %v1087, 0.0
      %v1152 = vmax.f32 %v1089, 0.0
      %v1153 = vmax.f32 %v1093, 0.0
      %v1154 = vmax.f32 %v1095, 0.0
      %v1155 = vmax.f32 %v1097, 0.0
      %v1156 = vmax.f32 %v1099, 0.0
      %v1157 = vmax.f32 %v1103, 0.0
      %v1158 = vmax.f32 %v1105, 0.0
      %v1159 = vmax.f32 %v1107, 0.0
      %v1160 = vmax.f32 %v1109, 0.0
      %v1161 = vmax.f32 %v1113, 0.0
      %v1162 = vmax.f32 %v1115, 0.0
      %v1163 = vmax.f32 %v1117, 0.0
      %v1164 = vmax.f32 %v1119, 0.0
      %v1165 = vmax.f32 %v1123, 0.0
      %v1166 = vmax.f32 %v1125, 0.0
      %v1167 = vmax.f32 %v1127, 0.0
      %v1168 = vmax.f32 %v1129, 0.0
      %v1169 = vmax.f32 %v1133, 0.0
      %v1170 = vmax.f32 %v1135, 0.0
      %v1171 = vmax.f32 %v1137, 0.0
      %v1172 = vmax.f32 %v1139, 0.0
      %v1173 = vmax.f32 %v1141, %v1142
      %1174 = vmax.xlane.f32.xlu0 %v1173
      %v1175 = vpop.xlane.xlu0 %1174
      %v1176 = vmax.f32 %v1143, %v1144
      %1177 = vmax.xlane.f32.xlu0 %v1176
      %v1178 = vpop.xlane.xlu0 %1177
      %v1179 = vmax.f32 %v1145, %v1146
      %1180 = vmax.xlane.f32.xlu0 %v1179
      %v1181 = vpop.xlane.xlu0 %1180
      %v1182 = vmax.f32 %v1147, %v1148
      %1183 = vmax.xlane.f32.xlu0 %v1182
      %v1184 = vpop.xlane.xlu0 %1183
      %v1185 = vmax.f32 %v1149, %v1150
      %1186 = vmax.xlane.f32.xlu0 %v1185
      %v1187 = vpop.xlane.xlu0 %1186
      %v1188 = vmax.f32 %v1151, %v1152
      %1189 = vmax.xlane.f32.xlu0 %v1188
      %v1190 = vpop.xlane.xlu0 %1189
      %v1191 = vmax.f32 %v1153, %v1154
      %1192 = vmax.xlane.f32.xlu0 %v1191
      %v1193 = vpop.xlane.xlu0 %1192
      %v1194 = vmax.f32 %v1155, %v1156
      %1195 = vmax.xlane.f32.xlu0 %v1194
      %v1196 = vpop.xlane.xlu0 %1195
      %v1197 = vmax.f32 %v1157, %v1158
      %1198 = vmax.xlane.f32.xlu0 %v1197
      %v1199 = vpop.xlane.xlu0 %1198
      %v1200 = vmax.f32 %v1159, %v1160
      %1201 = vmax.xlane.f32.xlu0 %v1200
      %v1202 = vpop.xlane.xlu0 %1201
      %v1203 = vmax.f32 %v1161, %v1162
      %1204 = vmax.xlane.f32.xlu0 %v1203
      %v1205 = vpop.xlane.xlu0 %1204
      %v1206 = vmax.f32 %v1163, %v1164
      %1207 = vmax.xlane.f32.xlu0 %v1206
      %v1208 = vpop.xlane.xlu0 %1207
      %v1209 = vmax.f32 %v1165, %v1166
      %1210 = vmax.xlane.f32.xlu0 %v1209
      %v1211 = vpop.xlane.xlu0 %1210
      %v1212 = vmax.f32 %v1167, %v1168
      %1213 = vmax.xlane.f32.xlu0 %v1212
      %v1214 = vpop.xlane.xlu0 %1213
      %v1215 = vmax.f32 %v1169, %v1170
      %1216 = vmax.xlane.f32.xlu0 %v1215
      %v1217 = vpop.xlane.xlu0 %1216
      %v1218 = vmax.f32 %v1171, %v1172
      %1219 = vmax.xlane.f32.xlu0 %v1218
      %v1220 = vpop.xlane.xlu0 %1219
      %v1221 = vsub.f32 %v1141, %v1175
      %v1222 = vsub.f32 %v1142, %v1175
      %v1223 = vsub.f32 %v1143, %v1178
      %v1224 = vsub.f32 %v1144, %v1178
      %v1225 = vsub.f32 %v1145, %v1181
      %v1226 = vsub.f32 %v1146, %v1181
      %v1227 = vsub.f32 %v1147, %v1184
      %v1228 = vsub.f32 %v1148, %v1184
      %v1229 = vsub.f32 %v1149, %v1187
      %v1230 = vsub.f32 %v1150, %v1187
      %v1231 = vsub.f32 %v1151, %v1190
      %v1232 = vsub.f32 %v1152, %v1190
      %v1233 = vsub.f32 %v1153, %v1193
      %v1234 = vsub.f32 %v1154, %v1193
      %v1235 = vsub.f32 %v1155, %v1196
      %v1236 = vsub.f32 %v1156, %v1196
      %v1237 = vsub.f32 %v1157, %v1199
      %v1238 = vsub.f32 %v1158, %v1199
      %v1239 = vsub.f32 %v1159, %v1202
      %v1240 = vsub.f32 %v1160, %v1202
      %v1241 = vsub.f32 %v1161, %v1205
      %v1242 = vsub.f32 %v1162, %v1205
      %v1243 = vsub.f32 %v1163, %v1208
      %v1244 = vsub.f32 %v1164, %v1208
      %v1245 = vsub.f32 %v1165, %v1211
      %v1246 = vsub.f32 %v1166, %v1211
      %v1247 = vsub.f32 %v1167, %v1214
      %v1248 = vsub.f32 %v1168, %v1214
      %v1249 = vsub.f32 %v1169, %v1217
      %v1250 = vsub.f32 %v1170, %v1217
      %v1251 = vsub.f32 %v1171, %v1220
      %v1252 = vsub.f32 %v1172, %v1220
      %v1253 = vmul.f32 %v1221, 1.442695
      %v1254 = vpow.pop %v1253
      %v1255 = vmul.f32 %v1222, 1.442695
      %v1256 = vpow.pop %v1255
      %v1257 = vmul.f32 %v1223, 1.442695
      %v1258 = vpow.pop %v1257
      %v1259 = vmul.f32 %v1224, 1.442695
      %v1260 = vpow.pop %v1259
      %v1261 = vmul.f32 %v1225, 1.442695
      %v1262 = vpow.pop %v1261
      %v1263 = vmul.f32 %v1226, 1.442695
      %v1264 = vpow.pop %v1263
      %v1265 = vmul.f32 %v1227, 1.442695
      %v1266 = vpow.pop %v1265
      %v1267 = vmul.f32 %v1228, 1.442695
      %v1268 = vpow.pop %v1267
      %v1269 = vmul.f32 %v1229, 1.442695
      %v1270 = vpow.pop %v1269
      %v1271 = vmul.f32 %v1230, 1.442695
      %v1272 = vpow.pop %v1271
      %v1273 = vmul.f32 %v1231, 1.442695
      %v1274 = vpow.pop %v1273
      %v1275 = vmul.f32 %v1232, 1.442695
      %v1276 = vpow.pop %v1275
      %v1277 = vmul.f32 %v1233, 1.442695
      %v1278 = vpow.pop %v1277
      %v1279 = vmul.f32 %v1234, 1.442695
      %v1280 = vpow.pop %v1279
      %v1281 = vmul.f32 %v1235, 1.442695
      %v1282 = vpow.pop %v1281
      %v1283 = vmul.f32 %v1236, 1.442695
      %v1284 = vpow.pop %v1283
      %v1285 = vmul.f32 %v1237, 1.442695
      %v1286 = vpow.pop %v1285
      %v1287 = vmul.f32 %v1238, 1.442695
      %v1288 = vpow.pop %v1287
      %v1289 = vmul.f32 %v1239, 1.442695
      %v1290 = vpow.pop %v1289
      %v1291 = vmul.f32 %v1240, 1.442695
      %v1292 = vpow.pop %v1291
      %v1293 = vmul.f32 %v1241, 1.442695
      %v1294 = vpow.pop %v1293
      %v1295 = vmul.f32 %v1242, 1.442695
      %v1296 = vpow.pop %v1295
      %v1297 = vmul.f32 %v1243, 1.442695
      %v1298 = vpow.pop %v1297
      %v1299 = vmul.f32 %v1244, 1.442695
      %v1300 = vpow.pop %v1299
      %v1301 = vmul.f32 %v1245, 1.442695
      %v1302 = vpow.pop %v1301
      %v1303 = vmul.f32 %v1246, 1.442695
      %v1304 = vpow.pop %v1303
      %v1305 = vmul.f32 %v1247, 1.442695
      %v1306 = vpow.pop %v1305
      %v1307 = vmul.f32 %v1248, 1.442695
      %v1308 = vpow.pop %v1307
      %v1309 = vmul.f32 %v1249, 1.442695
      %v1310 = vpow.pop %v1309
      %v1311 = vmul.f32 %v1250, 1.442695
      %v1312 = vpow.pop %v1311
      %v1313 = vmul.f32 %v1251, 1.442695
      %v1314 = vpow.pop %v1313
      %v1315 = vmul.f32 %v1252, 1.442695
      %v1316 = vpow.pop %v1315
      %v1317 = vadd.f32 %v1254, %v1256
      %1318 = vadd.xlane.f32.xlu0 %v1317
      %v1319 = vpop.xlane.xlu0 %1318
      %v1320 = vadd.f32 %v1258, %v1260
      %1321 = vadd.xlane.f32.xlu0 %v1320
      %v1322 = vpop.xlane.xlu0 %1321
      %v1323 = vadd.f32 %v1262, %v1264
      %1324 = vadd.xlane.f32.xlu0 %v1323
      %v1325 = vpop.xlane.xlu0 %1324
      %v1326 = vadd.f32 %v1266, %v1268
      %1327 = vadd.xlane.f32.xlu0 %v1326
      %v1328 = vpop.xlane.xlu0 %1327
      %v1329 = vadd.f32 %v1270, %v1272
      %1330 = vadd.xlane.f32.xlu0 %v1329
      %v1331 = vpop.xlane.xlu0 %1330
      %v1332 = vadd.f32 %v1274, %v1276
      %1333 = vadd.xlane.f32.xlu0 %v1332
      %v1334 = vpop.xlane.xlu0 %1333
      %v1335 = vadd.f32 %v1278, %v1280
      %1336 = vadd.xlane.f32.xlu0 %v1335
      %v1337 = vpop.xlane.xlu0 %1336
      %v1338 = vadd.f32 %v1282, %v1284
      %1339 = vadd.xlane.f32.xlu0 %v1338
      %v1340 = vpop.xlane.xlu0 %1339
      %v1341 = vadd.f32 %v1286, %v1288
      %1342 = vadd.xlane.f32.xlu0 %v1341
      %v1343 = vpop.xlane.xlu0 %1342
      %v1344 = vadd.f32 %v1290, %v1292
      %1345 = vadd.xlane.f32.xlu0 %v1344
      %v1346 = vpop.xlane.xlu0 %1345
      %v1347 = vadd.f32 %v1294, %v1296
      %1348 = vadd.xlane.f32.xlu0 %v1347
      %v1349 = vpop.xlane.xlu0 %1348
      %v1350 = vadd.f32 %v1298, %v1300
      %1351 = vadd.xlane.f32.xlu0 %v1350
      %v1352 = vpop.xlane.xlu0 %1351
      %v1353 = vadd.f32 %v1302, %v1304
      %1354 = vadd.xlane.f32.xlu0 %v1353
      %v1355 = vpop.xlane.xlu0 %1354
      %v1356 = vadd.f32 %v1306, %v1308
      %1357 = vadd.xlane.f32.xlu0 %v1356
      %v1358 = vpop.xlane.xlu0 %1357
      %v1359 = vadd.f32 %v1310, %v1312
      %1360 = vadd.xlane.f32.xlu0 %v1359
      %v1361 = vpop.xlane.xlu0 %1360
      %v1362 = vadd.f32 %v1314, %v1316
      %1363 = vadd.xlane.f32.xlu0 %v1362
      %v1364 = vpop.xlane.xlu0 %1363
      %v1365 = vrcp.pop %v1319
      %v1366 = vrcp.pop %v1322
      %v1367 = vrcp.pop %v1325
      %v1368 = vrcp.pop %v1328
      %v1369 = vrcp.pop %v1331
      %v1370 = vrcp.pop %v1334
      %v1371 = vrcp.pop %v1337
      %v1372 = vrcp.pop %v1340
      %v1373 = vrcp.pop %v1343
      %v1374 = vrcp.pop %v1346
      %v1375 = vrcp.pop %v1349
      %v1376 = vrcp.pop %v1352
      %v1377 = vrcp.pop %v1355
      %v1378 = vrcp.pop %v1358
      %v1379 = vrcp.pop %v1361
      %v1380 = vrcp.pop %v1364
      %v1381 = vmul.f32 %v1254, %v1365
      %v1382 = vmul.f32 %v1256, %v1365
      %v1383 = vmul.f32 %v1258, %v1366
      %v1384 = vmul.f32 %v1260, %v1366
      %v1385 = vmul.f32 %v1262, %v1367
      %v1386 = vmul.f32 %v1264, %v1367
      %v1387 = vmul.f32 %v1266, %v1368
      %v1388 = vmul.f32 %v1268, %v1368
      %v1389 = vmul.f32 %v1270, %v1369
      %v1390 = vmul.f32 %v1272, %v1369
      %v1391 = vmul.f32 %v1274, %v1370
      %v1392 = vmul.f32 %v1276, %v1370
      %v1393 = vmul.f32 %v1278, %v1371
      %v1394 = vmul.f32 %v1280, %v1371
      %v1395 = vmul.f32 %v1282, %v1372
      %v1396 = vmul.f32 %v1284, %v1372
      %v1397 = vmul.f32 %v1286, %v1373
      %v1398 = vmul.f32 %v1288, %v1373
      %v1399 = vmul.f32 %v1290, %v1374
      %v1400 = vmul.f32 %v1292, %v1374
      %v1401 = vmul.f32 %v1294, %v1375
      %v1402 = vmul.f32 %v1296, %v1375
      %v1403 = vmul.f32 %v1298, %v1376
      %v1404 = vmul.f32 %v1300, %v1376
      %v1405 = vmul.f32 %v1302, %v1377
      %v1406 = vmul.f32 %v1304, %v1377
      %v1407 = vmul.f32 %v1306, %v1378
      %v1408 = vmul.f32 %v1308, %v1378
      %v1409 = vmul.f32 %v1310, %v1379
      %v1410 = vmul.f32 %v1312, %v1379
      %v1411 = vmul.f32 %v1314, %v1380
      %v1412 = vmul.f32 %v1316, %v1380
      %v1413 = vpack.c.bf16 %v1383, %v1381
      %v1414 = vpack.c.bf16 %v1384, %v1382
      %v1415 = vpack.c.bf16 %v1387, %v1385
      %v1416 = vpack.c.bf16 %v1388, %v1386
      %v1417 = vpack.c.bf16 %v1391, %v1389
      %v1418 = vpack.c.bf16 %v1392, %v1390
      %v1419 = vpack.c.bf16 %v1395, %v1393
      %v1420 = vpack.c.bf16 %v1396, %v1394
      %v1421 = vpack.c.bf16 %v1399, %v1397
      %v1422 = vpack.c.bf16 %v1400, %v1398
      %v1423 = vpack.c.bf16 %v1403, %v1401
      %v1424 = vpack.c.bf16 %v1404, %v1402
      %v1425 = vpack.c.bf16 %v1407, %v1405
      %v1426 = vpack.c.bf16 %v1408, %v1406
      %v1427 = vpack.c.bf16 %v1411, %v1409
      %v1428 = vpack.c.bf16 %v1412, %v1410
      %v1429 = vadd.f32 %v772, %v773
      %1430 = vadd.xlane.f32.xlu0 %v1429
      %v1431 = vpop.xlane.xlu0 %1430
      %v1432 = vadd.f32 %v774, %v775
      %1433 = vadd.xlane.f32.xlu0 %v1432
      %v1434 = vpop.xlane.xlu0 %1433
      %v1435 = vadd.f32 %v776, %v777
      %1436 = vadd.xlane.f32.xlu0 %v1435
      %v1437 = vpop.xlane.xlu0 %1436
      %v1438 = vadd.f32 %v778, %v779
      %1439 = vadd.xlane.f32.xlu0 %v1438
      %v1440 = vpop.xlane.xlu0 %1439
      %v1441 = vadd.f32 %v780, %v781
      %1442 = vadd.xlane.f32.xlu0 %v1441
      %v1443 = vpop.xlane.xlu0 %1442
      %v1444 = vadd.f32 %v782, %v783
      %1445 = vadd.xlane.f32.xlu0 %v1444
      %v1446 = vpop.xlane.xlu0 %1445
      %v1447 = vadd.f32 %v784, %v785
      %1448 = vadd.xlane.f32.xlu0 %v1447
      %v1449 = vpop.xlane.xlu0 %1448
      %v1450 = vadd.f32 %v786, %v787
      %1451 = vadd.xlane.f32.xlu0 %v1450
      %v1452 = vpop.xlane.xlu0 %1451
      %v1453 = vadd.f32 %v788, %v789
      %1454 = vadd.xlane.f32.xlu0 %v1453
      %v1455 = vpop.xlane.xlu0 %1454
      %v1456 = vadd.f32 %v790, %v791
      %1457 = vadd.xlane.f32.xlu0 %v1456
      %v1458 = vpop.xlane.xlu0 %1457
      %v1459 = vadd.f32 %v792, %v793
      %1460 = vadd.xlane.f32.xlu0 %v1459
      %v1461 = vpop.xlane.xlu0 %1460
      %v1462 = vadd.f32 %v794, %v795
      %1463 = vadd.xlane.f32.xlu0 %v1462
      %v1464 = vpop.xlane.xlu0 %1463
      %v1465 = vadd.f32 %v796, %v797
      %1466 = vadd.xlane.f32.xlu0 %v1465
      %v1467 = vpop.xlane.xlu0 %1466
      %v1468 = vadd.f32 %v798, %v799
      %1469 = vadd.xlane.f32.xlu0 %v1468
      %v1470 = vpop.xlane.xlu0 %1469
      %v1471 = vadd.f32 %v800, %v801
      %1472 = vadd.xlane.f32.xlu0 %v1471
      %v1473 = vpop.xlane.xlu0 %1472
      %v1474 = vadd.f32 %v802, %v803
      %1475 = vadd.xlane.f32.xlu0 %v1474
      %v1476 = vpop.xlane.xlu0 %1475
      %v1477 = vrcp.pop 256.0
      %v1478 = vmul.f32 %v1431, %v1477
      %v1479 = vmul.f32 %v1434, %v1477
      %v1480 = vmul.f32 %v1437, %v1477
      %v1481 = vmul.f32 %v1440, %v1477
      %v1482 = vmul.f32 %v1443, %v1477
      %v1483 = vmul.f32 %v1446, %v1477
      %v1484 = vmul.f32 %v1449, %v1477
      %v1485 = vmul.f32 %v1452, %v1477
      %v1486 = vmul.f32 %v1455, %v1477
      %v1487 = vmul.f32 %v1458, %v1477
      %v1488 = vmul.f32 %v1461, %v1477
      %v1489 = vmul.f32 %v1464, %v1477
      %v1490 = vmul.f32 %v1467, %v1477
      %v1491 = vmul.f32 %v1470, %v1477
      %v1492 = vmul.f32 %v1473, %v1477
      %v1493 = vmul.f32 %v1476, %v1477
      %v1494 = vadd.f32 %v1478, %v804
      %v1495 = vadd.f32 %v1478, %v805
      %v1496 = vadd.f32 %v1479, %v806
      %v1497 = vadd.f32 %v1479, %v807
      %v1498 = vadd.f32 %v1480, %v808
      %v1499 = vadd.f32 %v1480, %v809
      %v1500 = vadd.f32 %v1481, %v810
      %v1501 = vadd.f32 %v1481, %v811
      %v1502 = vadd.f32 %v1482, %v812
      %v1503 = vadd.f32 %v1482, %v813
      %v1504 = vadd.f32 %v1483, %v814
      %v1505 = vadd.f32 %v1483, %v815
      %v1506 = vadd.f32 %v1484, %v816
      %v1507 = vadd.f32 %v1484, %v817
      %v1508 = vadd.f32 %v1485, %v818
      %v1509 = vadd.f32 %v1485, %v819
      %v1510 = vadd.f32 %v1486, %v820
      %v1511 = vadd.f32 %v1486, %v821
      %v1512 = vadd.f32 %v1487, %v822
      %v1513 = vadd.f32 %v1487, %v823
      %v1514 = vadd.f32 %v1488, %v824
      %v1515 = vadd.f32 %v1488, %v825
      %v1516 = vadd.f32 %v1489, %v826
      %v1517 = vadd.f32 %v1489, %v827
      %v1518 = vadd.f32 %v1490, %v828
      %v1519 = vadd.f32 %v1490, %v829
      %v1520 = vadd.f32 %v1491, %v830
      %v1521 = vadd.f32 %v1491, %v831
      %v1522 = vadd.f32 %v1492, %v832
      %v1523 = vadd.f32 %v1492, %v833
      %v1524 = vadd.f32 %v1493, %v834
      %v1525 = vadd.f32 %v1493, %v835
      %v1526 = vpack.c.bf16 %v1496, %v1494
      %v1527 = vpack.c.bf16 %v1497, %v1495
      %v1528 = vpack.c.bf16 %v1500, %v1498
      %v1529 = vpack.c.bf16 %v1501, %v1499
      %v1530 = vpack.c.bf16 %v1504, %v1502
      %v1531 = vpack.c.bf16 %v1505, %v1503
      %v1532 = vpack.c.bf16 %v1508, %v1506
      %v1533 = vpack.c.bf16 %v1509, %v1507
      %v1534 = vpack.c.bf16 %v1512, %v1510
      %v1535 = vpack.c.bf16 %v1513, %v1511
      %v1536 = vpack.c.bf16 %v1516, %v1514
      %v1537 = vpack.c.bf16 %v1517, %v1515
      %v1538 = vpack.c.bf16 %v1520, %v1518
      %v1539 = vpack.c.bf16 %v1521, %v1519
      %v1540 = vpack.c.bf16 %v1524, %v1522
      %v1541 = vpack.c.bf16 %v1525, %v1523
      %v1542 = vld [vmem:[%s4] sm:$0xf]
      %v1543 = vld [vmem:[%s4 + $0x4] sm:$0xf]
      %v1544 = vld [vmem:[%s4 + $0x8] sm:$0xf]
      %v1545 = vld [vmem:[%s4 + $0xc] sm:$0xf]
      %v1546 = vld [vmem:[%s4 + $0x10] sm:$0xf]
      %v1547 = vld [vmem:[%s4 + $0x14] sm:$0xf]
      %v1548 = vld [vmem:[%s4 + $0x18] sm:$0xf]
      %v1549 = vld [vmem:[%s4 + $0x1c] sm:$0xf]
      %v1550 = vld [vmem:[%s4 + $0x20] sm:$0xf]
      %v1551 = vld [vmem:[%s4 + $0x24] sm:$0xf]
      %v1552 = vld [vmem:[%s4 + $0x28] sm:$0xf]
      %v1553 = vld [vmem:[%s4 + $0x2c] sm:$0xf]
      %v1554 = vld [vmem:[%s4 + $0x30] sm:$0xf]
      %v1555 = vld [vmem:[%s4 + $0x34] sm:$0xf]
      %v1556 = vld [vmem:[%s4 + $0x38] sm:$0xf]
      %v1557 = vld [vmem:[%s4 + $0x3c] sm:$0xf]
      %v1558 = vld [vmem:[%s5] sm:$0xff]
      %v1559 = vld [vmem:[%s5 + $0x8] sm:$0xff]
      %v1560 = vld [vmem:[%s5 + $0x10] sm:$0xff]
      %v1561 = vld [vmem:[%s5 + $0x18] sm:$0xff]
      %v1562 = vld [vmem:[%s5 + $0x20] sm:$0xff]
      %v1563 = vld [vmem:[%s5 + $0x28] sm:$0xff]
      %v1564 = vld [vmem:[%s5 + $0x30] sm:$0xff]
      %v1565 = vld [vmem:[%s5 + $0x38] sm:$0xff]
      %v1566 = vld [vmem:[%s5 + $0x40] sm:$0xff]
      %v1567 = vld [vmem:[%s5 + $0x48] sm:$0xff]
      %v1568 = vld [vmem:[%s5 + $0x50] sm:$0xff]
      %v1569 = vld [vmem:[%s5 + $0x58] sm:$0xff]
      %v1570 = vld [vmem:[%s5 + $0x60] sm:$0xff]
      %v1571 = vld [vmem:[%s5 + $0x68] sm:$0xff]
      %v1572 = vld [vmem:[%s5 + $0x70] sm:$0xff]
      %v1573 = vld [vmem:[%s5 + $0x78] sm:$0xff]
      %1575 = vset.pattern.permute.xlu0 0
      %1576 = vperm.xlu0 %1575, %v1558
      %v1577 = vpop.permute.xlu0 %1576
      %1580 = vset.pattern.permute.xlu0 0
      %1581 = vperm.xlu0 %1580, %v1559
      %v1582 = vpop.permute.xlu0 %1581
      %1585 = vset.pattern.permute.xlu0 0
      %1586 = vperm.xlu0 %1585, %v1560
      %v1587 = vpop.permute.xlu0 %1586
      %1590 = vset.pattern.permute.xlu0 0
      %1591 = vperm.xlu0 %1590, %v1561
      %v1592 = vpop.permute.xlu0 %1591
      %1595 = vset.pattern.permute.xlu0 0
      %1596 = vperm.xlu0 %1595, %v1562
      %v1597 = vpop.permute.xlu0 %1596
      %1600 = vset.pattern.permute.xlu0 0
      %1601 = vperm.xlu0 %1600, %v1563
      %v1602 = vpop.permute.xlu0 %1601
      %1605 = vset.pattern.permute.xlu0 0
      %1606 = vperm.xlu0 %1605, %v1564
      %v1607 = vpop.permute.xlu0 %1606
      %1610 = vset.pattern.permute.xlu0 0
      %1611 = vperm.xlu0 %1610, %v1565
      %v1612 = vpop.permute.xlu0 %1611
      %1615 = vset.pattern.permute.xlu0 0
      %1616 = vperm.xlu0 %1615, %v1566
      %v1617 = vpop.permute.xlu0 %1616
      %1620 = vset.pattern.permute.xlu0 0
      %1621 = vperm.xlu0 %1620, %v1567
      %v1622 = vpop.permute.xlu0 %1621
      %1625 = vset.pattern.permute.xlu0 0
      %1626 = vperm.xlu0 %1625, %v1568
      %v1627 = vpop.permute.xlu0 %1626
      %1630 = vset.pattern.permute.xlu0 0
      %1631 = vperm.xlu0 %1630, %v1569
      %v1632 = vpop.permute.xlu0 %1631
      %1635 = vset.pattern.permute.xlu0 0
      %1636 = vperm.xlu0 %1635, %v1570
      %v1637 = vpop.permute.xlu0 %1636
      %1640 = vset.pattern.permute.xlu0 0
      %1641 = vperm.xlu0 %1640, %v1571
      %v1642 = vpop.permute.xlu0 %1641
      %1645 = vset.pattern.permute.xlu0 0
      %1646 = vperm.xlu0 %1645, %v1572
      %v1647 = vpop.permute.xlu0 %1646
      %1650 = vset.pattern.permute.xlu0 0
      %1651 = vperm.xlu0 %1650, %v1573
      %v1652 = vpop.permute.xlu0 %1651
      %v1670 = vunpack.c.l.b16 %v1542
      %v1671 = vunpack.c.l.b16 %v1543
      %v1672 = vunpack.c.l.b16 %v1544
      %v1673 = vunpack.c.l.b16 %v1545
      %v1674 = vunpack.c.l.b16 %v1546
      %v1675 = vunpack.c.l.b16 %v1547
      %v1676 = vunpack.c.l.b16 %v1548
      %v1677 = vunpack.c.l.b16 %v1549
      %v1678 = vunpack.c.l.b16 %v1550
      %v1679 = vunpack.c.l.b16 %v1551
      %v1680 = vunpack.c.l.b16 %v1552
      %v1681 = vunpack.c.l.b16 %v1553
      %v1682 = vunpack.c.l.b16 %v1554
      %v1683 = vunpack.c.l.b16 %v1555
      %v1684 = vunpack.c.l.b16 %v1556
      %v1685 = vunpack.c.l.b16 %v1557
      %v1686 = vpack.c.b16 %v1671, %v1670
      %v1687 = vpack.c.b16 %v1673, %v1672
      %v1688 = vpack.c.b16 %v1675, %v1674
      %v1689 = vpack.c.b16 %v1677, %v1676
      %v1690 = vpack.c.b16 %v1679, %v1678
      %v1691 = vpack.c.b16 %v1681, %v1680
      %v1692 = vpack.c.b16 %v1683, %v1682
      %v1693 = vpack.c.b16 %v1685, %v1684
      %1702 = vmatprep.subr.bf16.mxu0 %v1541
      %1703 = vmatpush1.bf16.msra.mxu0 %v1540
      %1704 = vmatprep.subr.bf16.mxu0 %v1539
      %1705 = vmatpush1.bf16.msra.mxu0 %v1538
      %1706 = vmatprep.subr.bf16.mxu0 %v1537
      %1707 = vmatpush1.bf16.msra.mxu0 %v1536
      %1708 = vmatprep.subr.bf16.mxu0 %v1535
      %1709 = vmatpush1.bf16.msra.mxu0 %v1534
      %1710 = vmatprep.subr.bf16.mxu0 %v1533
      %1711 = vmatpush1.bf16.msra.mxu0 %v1532
      %1712 = vmatprep.subr.bf16.mxu0 %v1531
      %1713 = vmatpush1.bf16.msra.mxu0 %v1530
      %1714 = vmatprep.subr.bf16.mxu0 %v1529
      %1715 = vmatpush1.bf16.msra.mxu0 %v1528
      %1716 = vmatprep.subr.bf16.mxu0 %v1527
      %1717 = vmatpush1.bf16.msra.mxu0 %v1526
      %1718 = vmatprep.subr.bf16.mxu0 0
      %1719 = vmatpush2.bf16.msra.mxu0 0
      %1720 = vmatprep.subr.bf16.mxu0 0
      %1721 = vmatpush2.bf16.msra.mxu0 0
      %1722 = vmatprep.subr.bf16.mxu0 0
      %1723 = vmatpush2.bf16.msra.mxu0 0
      %1724 = vmatprep.subr.bf16.mxu0 0
      %1725 = vmatpush2.bf16.msra.mxu0 0
      %1726 = vmatprep.subr.bf16.mxu0 0
      %1727 = vmatpush2.bf16.msra.mxu0 0
      %1728 = vmatprep.subr.bf16.mxu0 0
      %1729 = vmatpush2.bf16.msra.mxu0 0
      %1730 = vmatprep.subr.bf16.mxu0 0
      %1731 = vmatpush2.bf16.msra.mxu0 0
      %1732 = vmatprep.subr.bf16.mxu0 0
      %1733 = vmatpush2.bf16.msra.mxu0 0
      %1734 = vmatprep.mubr.bf16.mxu0 0
      %1735 = vmatmul.mubr.bf16.gmra.mxu0 %v1686
      %v1736 = vpop.f32.mrf.mxu0
      %v1737 = vadd.f32 %v1577, %v1736
      %v1738 = vpop.f32.mrf.mxu0
      %v1739 = vadd.f32 %v1577, %v1738
      %v1740 = vpop.f32.mrf.mxu0
      %v1741 = vadd.f32 %v1582, %v1740
      %v1742 = vpop.f32.mrf.mxu0
      %v1743 = vadd.f32 %v1582, %v1742
      %1744 = vmatprep.mubr.bf16.mxu0 0
      %1745 = vmatmul.mubr.bf16.gmra.mxu0 %v1687
      %v1746 = vpop.f32.mrf.mxu0
      %v1747 = vadd.f32 %v1587, %v1746
      %v1748 = vpop.f32.mrf.mxu0
      %v1749 = vadd.f32 %v1587, %v1748
      %v1750 = vpop.f32.mrf.mxu0
      %v1751 = vadd.f32 %v1592, %v1750
      %v1752 = vpop.f32.mrf.mxu0
      %v1753 = vadd.f32 %v1592, %v1752
      %1754 = vmatprep.mubr.bf16.mxu0 0
      %1755 = vmatmul.mubr.bf16.gmra.mxu0 %v1688
      %v1756 = vpop.f32.mrf.mxu0
      %v1757 = vadd.f32 %v1597, %v1756
      %v1758 = vpop.f32.mrf.mxu0
      %v1759 = vadd.f32 %v1597, %v1758
      %v1760 = vpop.f32.mrf.mxu0
      %v1761 = vadd.f32 %v1602, %v1760
      %v1762 = vpop.f32.mrf.mxu0
      %v1763 = vadd.f32 %v1602, %v1762
      %1764 = vmatprep.mubr.bf16.mxu0 0
      %1765 = vmatmul.mubr.bf16.gmra.mxu0 %v1689
      %v1766 = vpop.f32.mrf.mxu0
      %v1767 = vadd.f32 %v1607, %v1766
      %v1768 = vpop.f32.mrf.mxu0
      %v1769 = vadd.f32 %v1607, %v1768
      %v1770 = vpop.f32.mrf.mxu0
      %v1771 = vadd.f32 %v1612, %v1770
      %v1772 = vpop.f32.mrf.mxu0
      %v1773 = vadd.f32 %v1612, %v1772
      %1774 = vmatprep.mubr.bf16.mxu0 0
      %1775 = vmatmul.mubr.bf16.gmra.mxu0 %v1690
      %v1776 = vpop.f32.mrf.mxu0
      %v1777 = vadd.f32 %v1617, %v1776
      %v1778 = vpop.f32.mrf.mxu0
      %v1779 = vadd.f32 %v1617, %v1778
      %v1780 = vpop.f32.mrf.mxu0
      %v1781 = vadd.f32 %v1622, %v1780
      %v1782 = vpop.f32.mrf.mxu0
      %v1783 = vadd.f32 %v1622, %v1782
      %1784 = vmatprep.mubr.bf16.mxu0 0
      %1785 = vmatmul.mubr.bf16.gmra.mxu0 %v1691
      %v1786 = vpop.f32.mrf.mxu0
      %v1787 = vadd.f32 %v1627, %v1786
      %v1788 = vpop.f32.mrf.mxu0
      %v1789 = vadd.f32 %v1627, %v1788
      %v1790 = vpop.f32.mrf.mxu0
      %v1791 = vadd.f32 %v1632, %v1790
      %v1792 = vpop.f32.mrf.mxu0
      %v1793 = vadd.f32 %v1632, %v1792
      %1794 = vmatprep.mubr.bf16.mxu0 0
      %1795 = vmatmul.mubr.bf16.gmra.mxu0 %v1692
      %v1796 = vpop.f32.mrf.mxu0
      %v1797 = vadd.f32 %v1637, %v1796
      %v1798 = vpop.f32.mrf.mxu0
      %v1799 = vadd.f32 %v1637, %v1798
      %v1800 = vpop.f32.mrf.mxu0
      %v1801 = vadd.f32 %v1642, %v1800
      %v1802 = vpop.f32.mrf.mxu0
      %v1803 = vadd.f32 %v1642, %v1802
      %1804 = vmatprep.mubr.bf16.mxu0 0
      %1805 = vmatmul.mubr.bf16.gmra.mxu0 %v1693
      %v1806 = vpop.f32.mrf.mxu0
      %v1807 = vadd.f32 %v1647, %v1806
      %v1808 = vpop.f32.mrf.mxu0
      %v1809 = vadd.f32 %v1647, %v1808
      %v1810 = vpop.f32.mrf.mxu0
      %v1811 = vadd.f32 %v1652, %v1810
      %v1812 = vpop.f32.mrf.mxu0
      %v1813 = vadd.f32 %v1652, %v1812
      %1814 = vdwg.mxu0
      %v1815 = vmax.f32 %v1737, 0.0
      %v1816 = vmax.f32 %v1739, 0.0
      %v1817 = vmax.f32 %v1741, 0.0
      %v1818 = vmax.f32 %v1743, 0.0
      %v1819 = vmax.f32 %v1747, 0.0
      %v1820 = vmax.f32 %v1749, 0.0
      %v1821 = vmax.f32 %v1751, 0.0
      %v1822 = vmax.f32 %v1753, 0.0
      %v1823 = vmax.f32 %v1757, 0.0
      %v1824 = vmax.f32 %v1759, 0.0
      %v1825 = vmax.f32 %v1761, 0.0
      %v1826 = vmax.f32 %v1763, 0.0
      %v1827 = vmax.f32 %v1767, 0.0
      %v1828 = vmax.f32 %v1769, 0.0
      %v1829 = vmax.f32 %v1771, 0.0
      %v1830 = vmax.f32 %v1773, 0.0
      %v1831 = vmax.f32 %v1777, 0.0
      %v1832 = vmax.f32 %v1779, 0.0
      %v1833 = vmax.f32 %v1781, 0.0
      %v1834 = vmax.f32 %v1783, 0.0
      %v1835 = vmax.f32 %v1787, 0.0
      %v1836 = vmax.f32 %v1789, 0.0
      %v1837 = vmax.f32 %v1791, 0.0
      %v1838 = vmax.f32 %v1793, 0.0
      %v1839 = vmax.f32 %v1797, 0.0
      %v1840 = vmax.f32 %v1799, 0.0
      %v1841 = vmax.f32 %v1801, 0.0
      %v1842 = vmax.f32 %v1803, 0.0
      %v1843 = vmax.f32 %v1807, 0.0
      %v1844 = vmax.f32 %v1809, 0.0
      %v1845 = vmax.f32 %v1811, 0.0
      %v1846 = vmax.f32 %v1813, 0.0
      %v1847 = vpack.c.bf16 %v1817, %v1815
      %v1848 = vpack.c.bf16 %v1818, %v1816
      %v1849 = vpack.c.bf16 %v1821, %v1819
      %v1850 = vpack.c.bf16 %v1822, %v1820
      %v1851 = vpack.c.bf16 %v1825, %v1823
      %v1852 = vpack.c.bf16 %v1826, %v1824
      %v1853 = vpack.c.bf16 %v1829, %v1827
      %v1854 = vpack.c.bf16 %v1830, %v1828
      %v1855 = vpack.c.bf16 %v1833, %v1831
      %v1856 = vpack.c.bf16 %v1834, %v1832
      %v1857 = vpack.c.bf16 %v1837, %v1835
      %v1858 = vpack.c.bf16 %v1838, %v1836
      %v1859 = vpack.c.bf16 %v1841, %v1839
      %v1860 = vpack.c.bf16 %v1842, %v1840
      %v1861 = vpack.c.bf16 %v1845, %v1843
      %v1862 = vpack.c.bf16 %v1846, %v1844
      %v1863 = vld [vmem:[%s7] sm:$0xf]
      %1864 = vmatprep.subr.bf16.mxu0 %v851
      %1865 = vmatpush1.bf16.msra.mxu0 %v850
      %1866 = vmatprep.subr.bf16.mxu0 %v849
      %1867 = vmatpush1.bf16.msra.mxu0 %v848
      %1868 = vmatprep.subr.bf16.mxu0 %v847
      %1869 = vmatpush1.bf16.msra.mxu0 %v846
      %1870 = vmatprep.subr.bf16.mxu0 %v845
      %1871 = vmatpush1.bf16.msra.mxu0 %v844
      %1872 = vmatprep.subr.bf16.mxu0 %v843
      %1873 = vmatpush1.bf16.msra.mxu0 %v842
      %1874 = vmatprep.subr.bf16.mxu0 %v841
      %1875 = vmatpush1.bf16.msra.mxu0 %v840
      %1876 = vmatprep.subr.bf16.mxu0 %v839
      %1877 = vmatpush1.bf16.msra.mxu0 %v838
      %1878 = vmatprep.subr.bf16.mxu0 %v837
      %1879 = vmatpush1.bf16.msra.mxu0 %v836
      %1880 = vmatprep.subr.bf16.mxu0 0
      %1881 = vmatpush2.bf16.msra.mxu0 0
      %1882 = vmatprep.subr.bf16.mxu0 0
      %1883 = vmatpush2.bf16.msra.mxu0 0
      %1884 = vmatprep.subr.bf16.mxu0 0
      %1885 = vmatpush2.bf16.msra.mxu0 0
      %1886 = vmatprep.subr.bf16.mxu0 0
      %1887 = vmatpush2.bf16.msra.mxu0 0
      %1888 = vmatprep.subr.bf16.mxu0 0
      %1889 = vmatpush2.bf16.msra.mxu0 0
      %1890 = vmatprep.subr.bf16.mxu0 0
      %1891 = vmatpush2.bf16.msra.mxu0 0
      %1892 = vmatprep.subr.bf16.mxu0 0
      %1893 = vmatpush2.bf16.msra.mxu0 0
      %1894 = vmatprep.subr.bf16.mxu0 0
      %1895 = vmatpush2.bf16.msra.mxu0 0
      %1896 = vmatprep.mubr.bf16.mxu0 0
      %1897 = vmatmul.mubr.bf16.gmra.mxu0 %v1863
      %v1898 = vpop.f32.mrf.mxu0
      %v1899 = vadd.f32 0.0, %v1898
      %v1900 = vpop.f32.mrf.mxu0
      %v1901 = vadd.f32 0.0, %v1900
      %v1902 = vpop.f32.mrf.mxu0
      %v1903 = vpop.f32.mrf.mxu0
      %1904 = vdwg.mxu0
      %v1905 = vpack.c.bf16 %v1899, %v1899
      %v1906 = vpack.c.bf16 %v1901, %v1901
      %1907 = vmatprep.subr.bf16.mxu0 %v1428
      %1908 = vmatpush1.bf16.xpose.msra.mxu0 %v1427
      %1909 = vmatprep.subr.bf16.mxu0 %v1426
      %1910 = vmatpush1.bf16.xpose.msra.mxu0 %v1425
      %1911 = vmatprep.subr.bf16.mxu0 %v1424
      %1912 = vmatpush1.bf16.xpose.msra.mxu0 %v1423
      %1913 = vmatprep.subr.bf16.mxu0 %v1422
      %1914 = vmatpush1.bf16.xpose.msra.mxu0 %v1421
      %1915 = vmatprep.subr.bf16.mxu0 %v1420
      %1916 = vmatpush1.bf16.xpose.msra.mxu0 %v1419
      %1917 = vmatprep.subr.bf16.mxu0 %v1418
      %1918 = vmatpush1.bf16.xpose.msra.mxu0 %v1417
      %1919 = vmatprep.subr.bf16.mxu0 %v1416
      %1920 = vmatpush1.bf16.xpose.msra.mxu0 %v1415
      %1921 = vmatprep.subr.bf16.mxu0 %v1414
      %1922 = vmatpush1.bf16.xpose.msra.mxu0 %v1413
      %1923 = vmatprep.subr.bf16.mxu0 0
      %1924 = vmatpush2.bf16.xpose.msra.mxu0 0
      %1925 = vmatprep.subr.bf16.mxu0 0
      %1926 = vmatpush2.bf16.xpose.msra.mxu0 0
      %1927 = vmatprep.subr.bf16.mxu0 0
      %1928 = vmatpush2.bf16.xpose.msra.mxu0 0
      %1929 = vmatprep.subr.bf16.mxu0 0
      %1930 = vmatpush2.bf16.xpose.msra.mxu0 0
      %1931 = vmatprep.subr.bf16.mxu0 0
      %1932 = vmatpush2.bf16.xpose.msra.mxu0 0
      %1933 = vmatprep.subr.bf16.mxu0 0
      %1934 = vmatpush2.bf16.xpose.msra.mxu0 0
      %1935 = vmatprep.subr.bf16.mxu0 0
      %1936 = vmatpush2.bf16.xpose.msra.mxu0 0
      %1937 = vmatprep.subr.bf16.mxu0 0
      %1938 = vmatpush2.bf16.xpose.msra.mxu0 0
      %1939 = vmatprep.mubr.bf16.mxu0 %v1906
      %1940 = vmatmul.mubr.bf16.gmra.mxu0 %v1905
      %v1941 = vpop.f32.mrf.mxu0
      %v1942 = vadd.f32 0.0, %v1941
      %v1943 = vpop.f32.mrf.mxu0
      %v1944 = vpop.f32.mrf.mxu0
      %v1945 = vpop.f32.mrf.mxu0
      %1946 = vdwg.mxu0
      %v1947 = vld [vmem:[%s6] sm:$0xf]
      %v1948 = vpack.c.bf16 %v1942, %v1942
      %1949 = vmatprep.subr.bf16.mxu0 %v1862
      %1950 = vmatpush1.bf16.msra.mxu0 %v1861
      %1951 = vmatprep.subr.bf16.mxu0 %v1860
      %1952 = vmatpush1.bf16.msra.mxu0 %v1859
      %1953 = vmatprep.subr.bf16.mxu0 %v1858
      %1954 = vmatpush1.bf16.msra.mxu0 %v1857
      %1955 = vmatprep.subr.bf16.mxu0 %v1856
      %1956 = vmatpush1.bf16.msra.mxu0 %v1855
      %1957 = vmatprep.subr.bf16.mxu0 %v1854
      %1958 = vmatpush1.bf16.msra.mxu0 %v1853
      %1959 = vmatprep.subr.bf16.mxu0 %v1852
      %1960 = vmatpush1.bf16.msra.mxu0 %v1851
      %1961 = vmatprep.subr.bf16.mxu0 %v1850
      %1962 = vmatpush1.bf16.msra.mxu0 %v1849
      %1963 = vmatprep.subr.bf16.mxu0 %v1848
      %1964 = vmatpush1.bf16.msra.mxu0 %v1847
      %1965 = vmatprep.subr.bf16.mxu0 0
      %1966 = vmatpush2.bf16.msra.mxu0 0
      %1967 = vmatprep.subr.bf16.mxu0 0
      %1968 = vmatpush2.bf16.msra.mxu0 0
      %1969 = vmatprep.subr.bf16.mxu0 0
      %1970 = vmatpush2.bf16.msra.mxu0 0
      %1971 = vmatprep.subr.bf16.mxu0 0
      %1972 = vmatpush2.bf16.msra.mxu0 0
      %1973 = vmatprep.subr.bf16.mxu0 0
      %1974 = vmatpush2.bf16.msra.mxu0 0
      %1975 = vmatprep.subr.bf16.mxu0 0
      %1976 = vmatpush2.bf16.msra.mxu0 0
      %1977 = vmatprep.subr.bf16.mxu0 0
      %1978 = vmatpush2.bf16.msra.mxu0 0
      %1979 = vmatprep.subr.bf16.mxu0 0
      %1980 = vmatpush2.bf16.msra.mxu0 0
      %1981 = vmatprep.mubr.bf16.mxu0 0
      %1982 = vmatmul.mubr.bf16.gmra.mxu0 %v1948
      %v1983 = vpop.f32.mrf.mxu0
      %v1984 = vadd.f32 0.0, %v1983
      %v1985 = vpop.f32.mrf.mxu0
      %v1986 = vadd.f32 0.0, %v1985
      %v1987 = vpop.f32.mrf.mxu0
      %v1988 = vpop.f32.mrf.mxu0
      %1989 = vdwg.mxu0
      %1990 = vmatprep.subr.bf16.mxu0 %v867
      %1991 = vmatpush1.bf16.msra.mxu0 %v866
      %1992 = vmatprep.subr.bf16.mxu0 %v865
      %1993 = vmatpush1.bf16.msra.mxu0 %v864
      %1994 = vmatprep.subr.bf16.mxu0 %v863
      %1995 = vmatpush1.bf16.msra.mxu0 %v862
      %1996 = vmatprep.subr.bf16.mxu0 %v861
      %1997 = vmatpush1.bf16.msra.mxu0 %v860
      %1998 = vmatprep.subr.bf16.mxu0 %v859
      %1999 = vmatpush1.bf16.msra.mxu0 %v858
      %2000 = vmatprep.subr.bf16.mxu0 %v857
      %2001 = vmatpush1.bf16.msra.mxu0 %v856
      %2002 = vmatprep.subr.bf16.mxu0 %v855
      %2003 = vmatpush1.bf16.msra.mxu0 %v854
      %2004 = vmatprep.subr.bf16.mxu0 %v853
      %2005 = vmatpush1.bf16.msra.mxu0 %v852
      %2006 = vmatprep.subr.bf16.mxu0 0
      %2007 = vmatpush2.bf16.msra.mxu0 0
      %2008 = vmatprep.subr.bf16.mxu0 0
      %2009 = vmatpush2.bf16.msra.mxu0 0
      %2010 = vmatprep.subr.bf16.mxu0 0
      %2011 = vmatpush2.bf16.msra.mxu0 0
      %2012 = vmatprep.subr.bf16.mxu0 0
      %2013 = vmatpush2.bf16.msra.mxu0 0
      %2014 = vmatprep.subr.bf16.mxu0 0
      %2015 = vmatpush2.bf16.msra.mxu0 0
      %2016 = vmatprep.subr.bf16.mxu0 0
      %2017 = vmatpush2.bf16.msra.mxu0 0
      %2018 = vmatprep.subr.bf16.mxu0 0
      %2019 = vmatpush2.bf16.msra.mxu0 0
      %2020 = vmatprep.subr.bf16.mxu0 0
      %2021 = vmatpush2.bf16.msra.mxu0 0
      %2022 = vmatprep.mubr.bf16.mxu0 0
      %2023 = vmatmul.mubr.bf16.gmra.mxu0 %v1947
      %v2024 = vpop.f32.mrf.mxu0
      %v2025 = vadd.f32 %v1984, %v2024
      %v2026 = vpop.f32.mrf.mxu0
      %v2027 = vadd.f32 %v1986, %v2026
      %v2028 = vpop.f32.mrf.mxu0
      %v2029 = vpop.f32.mrf.mxu0
      %2030 = vdwg.mxu0
      %v2031 = vld [vmem:[%s8] sm:$0xff]
      %2033 = vset.pattern.permute.xlu0 0
      %2034 = vperm.xlu0 %2033, %v2031
      %v2035 = vpop.permute.xlu0 %2034
      %v2037 = vadd.f32 %v2025, %v2035
      %v2038 = vadd.f32 %v2027, %v2035
      %2039 = vst [vmem:[%s332] sm:$0xff] %v2037
      %2040 = vst [vmem:[%s332 + $0x8] sm:$0xff] %v2038
      %p2041 = scmp.lt.s32.totalorder %s20, 1
      %s2042 = scalar_select %p2041, %s20, 1
      %s2043 = smul.addr %s2042, 2
      %s2044 = smul.addr %s2043, 8
      %s2045 = scalar_lea.vmem %s9, %s2044
      // Predicated region
      $region57: #{decoder_forward.1} parent=55 // pred_check
        %p2046 = pneg %p232
      $region58: #{decoder_forward.1} parent=55 // pred_check_branch
        %2048 = sbr.rel (%p2046) target = $region60
      $region59: #{decoder_forward.1} parent=55 // pred_region
        _
      $region60: #{decoder_forward.1} parent=55 // pred_fallthru
        _
    $region56: #{decoder_forward.1} parent=5 // pred_fallthru
      _
    %p2049 = scmp.le.s32.totalorder 2, %s15
    // Predicated region
    $region61: #{decoder_forward.1} parent=5 // pred_check
      %p2050 = pneg %p2049
    $region62: #{decoder_forward.1} parent=5 // pred_check_branch
      %2052 = sbr.rel (%p2050) target = $region64
    $region63: #{decoder_forward.1} parent=5 // pred_region
      %s2053 = ssub.s32 %s15, 2
      // Predicated region
      $region65: #{decoder_forward.1} parent=63 // pred_check
        %p2054 = pneg %p238
      $region66: #{decoder_forward.1} parent=63 // pred_check_branch
        %2056 = sbr.rel (%p2054) target = $region68
      $region67: #{decoder_forward.1} parent=63 // pred_region
        %p2057 = scmp.lt.s32.totalorder %s21, 1
        %s2058 = scalar_select %p2057, %s21, 1
        %s2059 = smul.addr %s2058, 2
        %s2060 = smul.addr %s2059, 8
        %s2061 = scalar_lea.vmem %s9, %s2060
      $region68: #{decoder_forward.1} parent=63 // pred_fallthru
        _
    $region64: #{decoder_forward.1} parent=5 // pred_fallthru
      _
  $region6: #{decoder_forward.1} parent=0 // loop_footer
    %s19 = sadd.s32 1, %s15
  $region7: #{decoder_forward.1} parent=0 // loop_footer_branch
    %14 = sbr.rel target = $region3
  $region8: #{decoder_forward.1} parent=0 // loop_exit
    _

</llo_original>
